<compile_context>
chip_gen: v7x
topology: tpu7x:2x2x1
jax: 0.10.0
libtpu: 0.0.40
codegen_flags: <defaults>
</compile_context>

<pallas_src>
import functools
import math

import jax
import jax.numpy as jnp
from jax.experimental import pallas as pl
from jax.experimental.pallas import tpu as pltpu

# ---------------- model hyper-parameters (small, consistent with the module) --
DIM = 32          # C
NUM_HEADS = 4     # H
HEAD_DIM = DIM // NUM_HEADS
MLP_RATIO = 4.0
HIDDEN = int(DIM * MLP_RATIO)
BATCH = 2
SEQ = 8           # N
LN_EPS = 1e-5
SCALE = HEAD_DIM ** (-0.5)
_INV_SQRT2 = 1.0 / math.sqrt(2.0)


def _encoder_block_kernel(x_ref, ln_w_ref, ln_b_ref, qkv_w_ref,
                          proj_w_ref, proj_b_ref,
                          fc1_w_ref, fc1_b_ref, fc2_w_ref, fc2_b_ref,
                          o_ref, ctx_ref, *, batch, seq, num_heads, head_dim):
    """Single invocation: whole (B*N, C) problem lives in VMEM."""
    dim = num_heads * head_dim

    x = x_ref[...]                     # (B*N, C) f32
    ln_w = ln_w_ref[...]               # (1, C)  — hoisted, reused by both LN calls
    ln_b = ln_b_ref[...]               # (1, C)

    def layernorm(t):
        mu = jnp.mean(t, axis=-1, keepdims=True)
        d = t - mu
        var = jnp.mean(d * d, axis=-1, keepdims=True)
        return d * jax.lax.rsqrt(var + LN_EPS) * ln_w + ln_b

    # ---------------- Multi-head attention branch ----------------
    h = layernorm(x)
    # qkv_w is pre-transposed on the host to (C, 3C); output columns are
    # already head-major: [q_h0 | q_h1 | .. | k_h0 | .. | v_h{H-1}].
    qkv = jnp.dot(h, qkv_w_ref[...], preferred_element_type=jnp.float32)   # (B*N, 3C)

    # Unrolled static loop over (batch, head): 8x8 dots, static lane slices,
    # zero reshape/transpose relayouts.
    for b in range(batch):
        r0 = b * seq
        for hh in range(num_heads):
            c0 = hh * head_dim
            q = qkv[r0:r0 + seq, c0:c0 + head_dim]                     # (N, hd)
            k = qkv[r0:r0 + seq, dim + c0:dim + c0 + head_dim]         # (N, hd)
            v = qkv[r0:r0 + seq, 2 * dim + c0:2 * dim + c0 + head_dim] # (N, hd)

            # s = q @ k.T without materializing a transpose.
            s = jax.lax.dot_general(q, k, (((1,), (1,)), ((), ())),
                                    preferred_element_type=jnp.float32) * SCALE
            s = s - jnp.max(s, axis=-1, keepdims=True)
            p = jnp.exp(s)
            inv = pl.reciprocal(jnp.sum(p, axis=-1, keepdims=True))    # exact
            p = p * inv
            ctx_ref[r0:r0 + seq, c0:c0 + head_dim] = jnp.dot(
                p, v, preferred_element_type=jnp.float32)

    attn_out = jnp.dot(ctx_ref[...], proj_w_ref[...],
                       preferred_element_type=jnp.float32) + proj_b_ref[...]
    x = x + attn_out

    # ---------------- MLP branch (same LayerNorm params reused) ----------------
    h = layernorm(x)
    h1 = jnp.dot(h, fc1_w_ref[...],
                 preferred_element_type=jnp.float32) + fc1_b_ref[...]   # (B*N, HIDDEN)
    # exact GELU (nn.GELU default): 0.5*x*(1+erf(x/sqrt(2)))
    g = 0.5 * h1 * (1.0 + jax.lax.erf(h1 * _INV_SQRT2))
    h2 = jnp.dot(g, fc2_w_ref[...],
                 preferred_element_type=jnp.float32) + fc2_b_ref[...]   # (B*N, C)
    o_ref[...] = x + h2


@jax.jit
def encoder_block(x, params):
    """x: (B, N, C) float32 -> (B, N, C) float32."""
    B, N, C = x.shape
    assert C == DIM and C % NUM_HEADS == 0

    kernel = functools.partial(
        _encoder_block_kernel,
        batch=B, seq=N, num_heads=NUM_HEADS, head_dim=HEAD_DIM)

    vmem_specs = [pl.BlockSpec(memory_space=pltpu.MemorySpace.VMEM)
                  for _ in range(10)]

    # Single invocation, no grid: whole problem (< 100 KiB) sits in VMEM.
    # (If B grows large, reintroduce a leading "parallel" grid axis over
    #  batch blocks instead.)
    out_flat = pl.pallas_call(
        kernel,
        out_shape=jax.ShapeDtypeStruct((B * N, C), jnp.float32),
        in_specs=vmem_specs,
        out_specs=pl.BlockSpec(memory_space=pltpu.MemorySpace.VMEM),
        scratch_shapes=[pltpu.VMEM((B * N, C), jnp.float32)],   # per-head ctx buffer
    )(x.reshape(B * N, C),
      params["ln_w"], params["ln_b"],
      params["qkv_w"].T,                       # host-side pre-transpose -> (C, 3C)
      params["proj_w"].T, params["proj_b"],    # (C, C)
      params["fc1_w"].T, params["fc1_b"],      # (C, HIDDEN)
      params["fc2_w"].T, params["fc2_b"])      # (HIDDEN, C)

    return out_flat.reshape(B, N, C)


def init_params(key):
    ks = jax.random.split(key, 4)
    std = 0.02
    return {
        "ln_w":   jnp.ones((1, DIM), jnp.float32),
        "ln_b":   jnp.zeros((1, DIM), jnp.float32),
        "qkv_w":  std * jax.random.normal(ks[0], (3 * DIM, DIM), jnp.float32),
        "proj_w": std * jax.random.normal(ks[1], (DIM, DIM), jnp.float32),
        "proj_b": jnp.zeros((1, DIM), jnp.float32),
        "fc1_w":  std * jax.random.normal(ks[2], (HIDDEN, DIM), jnp.float32),
        "fc1_b":  jnp.zeros((1, HIDDEN), jnp.float32),
        "fc2_w":  std * jax.random.normal(ks[3], (DIM, HIDDEN), jnp.float32),
        "fc2_b":  jnp.zeros((1, DIM), jnp.float32),
    }


def encoder_block_ref(x, p):
    """Pure-JAX reference mirroring the PyTorch forward (eval mode)."""
    def ln(h):
        mu = jnp.mean(h, axis=-1, keepdims=True)
        var = jnp.mean((h - mu) ** 2, axis=-1, keepdims=True)
        return (h - mu) / jnp.sqrt(var + LN_EPS) * p["ln_w"][0] + p["ln_b"][0]

    B, N, C = x.shape
    h = ln(x)
    qkv = h @ p["qkv_w"].T
    qkv = qkv.reshape(B, N, 3, NUM_HEADS, HEAD_DIM).transpose(2, 0, 3, 1, 4)
    q, k, v = qkv[0], qkv[1], qkv[2]                      # (B, H, N, hd)
    attn = jnp.einsum('bhnd,bhmd->bhnm', q, k) * SCALE
    attn = jax.nn.softmax(attn, axis=-1)
    ctx = jnp.einsum('bhnm,bhmd->bhnd', attn, v).transpose(0, 2, 1, 3).reshape(B, N, C)
    x = x + (ctx @ p["proj_w"].T + p["proj_b"][0])

    h = ln(x)
    h1 = h @ p["fc1_w"].T + p["fc1_b"][0]
    g = 0.5 * h1 * (1.0 + jax.lax.erf(h1 / jnp.sqrt(2.0)))
    x = x + (g @ p["fc2_w"].T + p["fc2_b"][0])
    return x


if __name__ == "__main__":
    key = jax.random.PRNGKey(0)
    kx, kp = jax.random.split(key)
    x = jax.random.normal(kx, (BATCH, SEQ, DIM), jnp.float32)
    params = init_params(kp)

    out = jax.block_until_ready(encoder_block(x, params))

    ref = encoder_block_ref(x, params)
    assert out.shape == (BATCH, SEQ, DIM)
    err = jnp.max(jnp.abs(out - ref))
    assert jnp.allclose(out, ref, rtol=1e-4, atol=1e-4), f"max abs err {err}"
    print("KERNEL_OK")
</pallas_src>

<mosaic_0001>
module attributes {stable_mosaic.version = 11 : i64} {
  func.func @_encoder_block_kernel(%arg0: memref<16x32xf32, #tpu.memory_space<vmem>>, %arg1: memref<1x32xf32, #tpu.memory_space<vmem>>, %arg2: memref<1x32xf32, #tpu.memory_space<vmem>>, %arg3: memref<32x96xf32, #tpu.memory_space<vmem>>, %arg4: memref<32x32xf32, #tpu.memory_space<vmem>>, %arg5: memref<1x32xf32, #tpu.memory_space<vmem>>, %arg6: memref<32x128xf32, #tpu.memory_space<vmem>>, %arg7: memref<1x128xf32, #tpu.memory_space<vmem>>, %arg8: memref<128x32xf32, #tpu.memory_space<vmem>>, %arg9: memref<1x32xf32, #tpu.memory_space<vmem>>, %arg10: memref<16x32xf32, #tpu.memory_space<vmem>>, %arg11: memref<16x32xf32, #tpu.memory_space<vmem>>) attributes {dimension_semantics = [], scalar_prefetch = 0 : i64, scratch_operands = 1 : i64, tpu.core_type = #tpu.core_type<tc>} {
    %c0 = arith.constant 0 : index
    %c0_0 = arith.constant 0 : index
    %0 = vector.load %arg0[%c0, %c0_0] : memref<16x32xf32, #tpu.memory_space<vmem>>, vector<16x32xf32>
    %c0_1 = arith.constant 0 : index
    %c0_2 = arith.constant 0 : index
    %1 = vector.load %arg1[%c0_1, %c0_2] : memref<1x32xf32, #tpu.memory_space<vmem>>, vector<1x32xf32>
    %c0_3 = arith.constant 0 : index
    %c0_4 = arith.constant 0 : index
    %2 = vector.load %arg2[%c0_3, %c0_4] : memref<1x32xf32, #tpu.memory_space<vmem>>, vector<1x32xf32>
    %cst = arith.constant dense<0.000000e+00> : vector<16xf32>
    %3 = vector.multi_reduction <add>, %0, %cst [1] : vector<16x32xf32> to vector<16xf32>
    %4 = vector.shape_cast %3 : vector<16xf32> to vector<16x1xf32>
    %cst_5 = arith.constant 3.200000e+01 : f32
    %5 = vector.broadcast %cst_5 : f32 to vector<16x1xf32>
    %6 = arith.divf %4, %5 : vector<16x1xf32>
    %7 = vector.broadcast %6 : vector<16x1xf32> to vector<16x32xf32>
    %8 = arith.subf %0, %7 : vector<16x32xf32>
    %9 = arith.mulf %8, %8 : vector<16x32xf32>
    %cst_6 = arith.constant dense<0.000000e+00> : vector<16xf32>
    %10 = vector.multi_reduction <add>, %9, %cst_6 [1] : vector<16x32xf32> to vector<16xf32>
    %11 = vector.shape_cast %10 : vector<16xf32> to vector<16x1xf32>
    %cst_7 = arith.constant 3.200000e+01 : f32
    %12 = vector.broadcast %cst_7 : f32 to vector<16x1xf32>
    %13 = arith.divf %11, %12 : vector<16x1xf32>
    %cst_8 = arith.constant 9.99999974E-6 : f32
    %14 = vector.broadcast %cst_8 : f32 to vector<16x1xf32>
    %15 = arith.addf %13, %14 : vector<16x1xf32>
    %16 = math.rsqrt %15 : vector<16x1xf32>
    %17 = vector.broadcast %16 : vector<16x1xf32> to vector<16x32xf32>
    %18 = arith.mulf %8, %17 : vector<16x32xf32>
    %19 = vector.broadcast %1 : vector<1x32xf32> to vector<16x32xf32>
    %20 = arith.mulf %18, %19 : vector<16x32xf32>
    %21 = vector.broadcast %2 : vector<1x32xf32> to vector<16x32xf32>
    %22 = arith.addf %20, %21 : vector<16x32xf32>
    %c0_9 = arith.constant 0 : index
    %c0_10 = arith.constant 0 : index
    %23 = vector.load %arg3[%c0_9, %c0_10] : memref<32x96xf32, #tpu.memory_space<vmem>>, vector<32x96xf32>
    %cst_11 = arith.constant dense<0.000000e+00> : vector<16x96xf32>
    %24 = tpu.matmul %22, %23, %cst_11 {dimension_numbers = #tpu.dot_dimension_numbers<[1], [0], [0], [1], [0, 0, 1, 1], [], []>} : vector<16x32xf32>, vector<32x96xf32>, vector<16x96xf32> -> vector<16x96xf32>
    %25 = vector.extract_strided_slice %24 {offsets = [0, 0], sizes = [8, 8], strides = [1, 1]} : vector<16x96xf32> to vector<8x8xf32>
    %26 = vector.extract_strided_slice %24 {offsets = [0, 32], sizes = [8, 8], strides = [1, 1]} : vector<16x96xf32> to vector<8x8xf32>
    %27 = vector.extract_strided_slice %24 {offsets = [0, 64], sizes = [8, 8], strides = [1, 1]} : vector<16x96xf32> to vector<8x8xf32>
    %cst_12 = arith.constant dense<0.000000e+00> : vector<8x8xf32>
    %28 = tpu.matmul %25, %26, %cst_12 {dimension_numbers = #tpu.dot_dimension_numbers<[1], [1], [0], [0], [0, 0, 1, 0], [], []>} : vector<8x8xf32>, vector<8x8xf32>, vector<8x8xf32> -> vector<8x8xf32>
    %cst_13 = arith.constant 0.353553385 : f32
    %29 = vector.broadcast %cst_13 : f32 to vector<8x8xf32>
    %30 = arith.mulf %28, %29 : vector<8x8xf32>
    %cst_14 = arith.constant dense<0xFF800000> : vector<8xf32>
    %31 = vector.multi_reduction <maximumf>, %30, %cst_14 [1] : vector<8x8xf32> to vector<8xf32>
    %32 = vector.shape_cast %31 : vector<8xf32> to vector<8x1xf32>
    %33 = vector.broadcast %32 : vector<8x1xf32> to vector<8x8xf32>
    %34 = arith.subf %30, %33 : vector<8x8xf32>
    %35 = math.exp %34 : vector<8x8xf32>
    %cst_15 = arith.constant dense<0.000000e+00> : vector<8xf32>
    %36 = vector.multi_reduction <add>, %35, %cst_15 [1] : vector<8x8xf32> to vector<8xf32>
    %37 = vector.shape_cast %36 : vector<8xf32> to vector<8x1xf32>
    %38 = tpu.reciprocal %37 : vector<8x1xf32> -> vector<8x1xf32>
    %39 = vector.broadcast %38 : vector<8x1xf32> to vector<8x8xf32>
    %40 = arith.mulf %35, %39 : vector<8x8xf32>
    %cst_16 = arith.constant dense<0.000000e+00> : vector<8x8xf32>
    %41 = tpu.matmul %40, %27, %cst_16 {dimension_numbers = #tpu.dot_dimension_numbers<[1], [0], [0], [1], [0, 0, 1, 1], [], []>} : vector<8x8xf32>, vector<8x8xf32>, vector<8x8xf32> -> vector<8x8xf32>
    %c0_17 = arith.constant 0 : index
    %c0_18 = arith.constant 0 : index
    %42 = vector.load %arg11[%c0_17, %c0_18] : memref<16x32xf32, #tpu.memory_space<vmem>>, vector<8x8xf32>
    tpu.vector_store %arg11[%c0_17, %c0_18], %41 {strides = array<i32>} : memref<16x32xf32, #tpu.memory_space<vmem>>, vector<8x8xf32>,
    %43 = vector.extract_strided_slice %24 {offsets = [0, 8], sizes = [8, 8], strides = [1, 1]} : vector<16x96xf32> to vector<8x8xf32>
    %44 = vector.extract_strided_slice %24 {offsets = [0, 40], sizes = [8, 8], strides = [1, 1]} : vector<16x96xf32> to vector<8x8xf32>
    %45 = vector.extract_strided_slice %24 {offsets = [0, 72], sizes = [8, 8], strides = [1, 1]} : vector<16x96xf32> to vector<8x8xf32>
    %cst_19 = arith.constant dense<0.000000e+00> : vector<8x8xf32>
    %46 = tpu.matmul %43, %44, %cst_19 {dimension_numbers = #tpu.dot_dimension_numbers<[1], [1], [0], [0], [0, 0, 1, 0], [], []>} : vector<8x8xf32>, vector<8x8xf32>, vector<8x8xf32> -> vector<8x8xf32>
    %cst_20 = arith.constant 0.353553385 : f32
    %47 = vector.broadcast %cst_20 : f32 to vector<8x8xf32>
    %48 = arith.mulf %46, %47 : vector<8x8xf32>
    %cst_21 = arith.constant dense<0xFF800000> : vector<8xf32>
    %49 = vector.multi_reduction <maximumf>, %48, %cst_21 [1] : vector<8x8xf32> to vector<8xf32>
    %50 = vector.shape_cast %49 : vector<8xf32> to vector<8x1xf32>
    %51 = vector.broadcast %50 : vector<8x1xf32> to vector<8x8xf32>
    %52 = arith.subf %48, %51 : vector<8x8xf32>
    %53 = math.exp %52 : vector<8x8xf32>
    %cst_22 = arith.constant dense<0.000000e+00> : vector<8xf32>
    %54 = vector.multi_reduction <add>, %53, %cst_22 [1] : vector<8x8xf32> to vector<8xf32>
    %55 = vector.shape_cast %54 : vector<8xf32> to vector<8x1xf32>
    %56 = tpu.reciprocal %55 : vector<8x1xf32> -> vector<8x1xf32>
    %57 = vector.broadcast %56 : vector<8x1xf32> to vector<8x8xf32>
    %58 = arith.mulf %53, %57 : vector<8x8xf32>
    %cst_23 = arith.constant dense<0.000000e+00> : vector<8x8xf32>
    %59 = tpu.matmul %58, %45, %cst_23 {dimension_numbers = #tpu.dot_dimension_numbers<[1], [0], [0], [1], [0, 0, 1, 1], [], []>} : vector<8x8xf32>, vector<8x8xf32>, vector<8x8xf32> -> vector<8x8xf32>
    %c0_24 = arith.constant 0 : index
    %c8 = arith.constant 8 : index
    %60 = vector.load %arg11[%c0_24, %c8] : memref<16x32xf32, #tpu.memory_space<vmem>>, vector<8x8xf32>
    tpu.vector_store %arg11[%c0_24, %c8], %59 {strides = array<i32>} : memref<16x32xf32, #tpu.memory_space<vmem>>, vector<8x8xf32>,
    %61 = vector.extract_strided_slice %24 {offsets = [0, 16], sizes = [8, 8], strides = [1, 1]} : vector<16x96xf32> to vector<8x8xf32>
    %62 = vector.extract_strided_slice %24 {offsets = [0, 48], sizes = [8, 8], strides = [1, 1]} : vector<16x96xf32> to vector<8x8xf32>
    %63 = vector.extract_strided_slice %24 {offsets = [0, 80], sizes = [8, 8], strides = [1, 1]} : vector<16x96xf32> to vector<8x8xf32>
    %cst_25 = arith.constant dense<0.000000e+00> : vector<8x8xf32>
    %64 = tpu.matmul %61, %62, %cst_25 {dimension_numbers = #tpu.dot_dimension_numbers<[1], [1], [0], [0], [0, 0, 1, 0], [], []>} : vector<8x8xf32>, vector<8x8xf32>, vector<8x8xf32> -> vector<8x8xf32>
    %cst_26 = arith.constant 0.353553385 : f32
    %65 = vector.broadcast %cst_26 : f32 to vector<8x8xf32>
    %66 = arith.mulf %64, %65 : vector<8x8xf32>
    %cst_27 = arith.constant dense<0xFF800000> : vector<8xf32>
    %67 = vector.multi_reduction <maximumf>, %66, %cst_27 [1] : vector<8x8xf32> to vector<8xf32>
    %68 = vector.shape_cast %67 : vector<8xf32> to vector<8x1xf32>
    %69 = vector.broadcast %68 : vector<8x1xf32> to vector<8x8xf32>
    %70 = arith.subf %66, %69 : vector<8x8xf32>
    %71 = math.exp %70 : vector<8x8xf32>
    %cst_28 = arith.constant dense<0.000000e+00> : vector<8xf32>
    %72 = vector.multi_reduction <add>, %71, %cst_28 [1] : vector<8x8xf32> to vector<8xf32>
    %73 = vector.shape_cast %72 : vector<8xf32> to vector<8x1xf32>
    %74 = tpu.reciprocal %73 : vector<8x1xf32> -> vector<8x1xf32>
    %75 = vector.broadcast %74 : vector<8x1xf32> to vector<8x8xf32>
    %76 = arith.mulf %71, %75 : vector<8x8xf32>
    %cst_29 = arith.constant dense<0.000000e+00> : vector<8x8xf32>
    %77 = tpu.matmul %76, %63, %cst_29 {dimension_numbers = #tpu.dot_dimension_numbers<[1], [0], [0], [1], [0, 0, 1, 1], [], []>} : vector<8x8xf32>, vector<8x8xf32>, vector<8x8xf32> -> vector<8x8xf32>
    %c0_30 = arith.constant 0 : index
    %c16 = arith.constant 16 : index
    %78 = vector.load %arg11[%c0_30, %c16] : memref<16x32xf32, #tpu.memory_space<vmem>>, vector<8x8xf32>
    tpu.vector_store %arg11[%c0_30, %c16], %77 {strides = array<i32>} : memref<16x32xf32, #tpu.memory_space<vmem>>, vector<8x8xf32>,
    %79 = vector.extract_strided_slice %24 {offsets = [0, 24], sizes = [8, 8], strides = [1, 1]} : vector<16x96xf32> to vector<8x8xf32>
    %80 = vector.extract_strided_slice %24 {offsets = [0, 56], sizes = [8, 8], strides = [1, 1]} : vector<16x96xf32> to vector<8x8xf32>
    %81 = vector.extract_strided_slice %24 {offsets = [0, 88], sizes = [8, 8], strides = [1, 1]} : vector<16x96xf32> to vector<8x8xf32>
    %cst_31 = arith.constant dense<0.000000e+00> : vector<8x8xf32>
    %82 = tpu.matmul %79, %80, %cst_31 {dimension_numbers = #tpu.dot_dimension_numbers<[1], [1], [0], [0], [0, 0, 1, 0], [], []>} : vector<8x8xf32>, vector<8x8xf32>, vector<8x8xf32> -> vector<8x8xf32>
    %cst_32 = arith.constant 0.353553385 : f32
    %83 = vector.broadcast %cst_32 : f32 to vector<8x8xf32>
    %84 = arith.mulf %82, %83 : vector<8x8xf32>
    %cst_33 = arith.constant dense<0xFF800000> : vector<8xf32>
    %85 = vector.multi_reduction <maximumf>, %84, %cst_33 [1] : vector<8x8xf32> to vector<8xf32>
    %86 = vector.shape_cast %85 : vector<8xf32> to vector<8x1xf32>
    %87 = vector.broadcast %86 : vector<8x1xf32> to vector<8x8xf32>
    %88 = arith.subf %84, %87 : vector<8x8xf32>
    %89 = math.exp %88 : vector<8x8xf32>
    %cst_34 = arith.constant dense<0.000000e+00> : vector<8xf32>
    %90 = vector.multi_reduction <add>, %89, %cst_34 [1] : vector<8x8xf32> to vector<8xf32>
    %91 = vector.shape_cast %90 : vector<8xf32> to vector<8x1xf32>
    %92 = tpu.reciprocal %91 : vector<8x1xf32> -> vector<8x1xf32>
    %93 = vector.broadcast %92 : vector<8x1xf32> to vector<8x8xf32>
    %94 = arith.mulf %89, %93 : vector<8x8xf32>
    %cst_35 = arith.constant dense<0.000000e+00> : vector<8x8xf32>
    %95 = tpu.matmul %94, %81, %cst_35 {dimension_numbers = #tpu.dot_dimension_numbers<[1], [0], [0], [1], [0, 0, 1, 1], [], []>} : vector<8x8xf32>, vector<8x8xf32>, vector<8x8xf32> -> vector<8x8xf32>
    %c0_36 = arith.constant 0 : index
    %c24 = arith.constant 24 : index
    %96 = vector.load %arg11[%c0_36, %c24] : memref<16x32xf32, #tpu.memory_space<vmem>>, vector<8x8xf32>
    tpu.vector_store %arg11[%c0_36, %c24], %95 {strides = array<i32>} : memref<16x32xf32, #tpu.memory_space<vmem>>, vector<8x8xf32>,
    %97 = vector.extract_strided_slice %24 {offsets = [8, 0], sizes = [8, 8], strides = [1, 1]} : vector<16x96xf32> to vector<8x8xf32>
    %98 = vector.extract_strided_slice %24 {offsets = [8, 32], sizes = [8, 8], strides = [1, 1]} : vector<16x96xf32> to vector<8x8xf32>
    %99 = vector.extract_strided_slice %24 {offsets = [8, 64], sizes = [8, 8], strides = [1, 1]} : vector<16x96xf32> to vector<8x8xf32>
    %cst_37 = arith.constant dense<0.000000e+00> : vector<8x8xf32>
    %100 = tpu.matmul %97, %98, %cst_37 {dimension_numbers = #tpu.dot_dimension_numbers<[1], [1], [0], [0], [0, 0, 1, 0], [], []>} : vector<8x8xf32>, vector<8x8xf32>, vector<8x8xf32> -> vector<8x8xf32>
    %cst_38 = arith.constant 0.353553385 : f32
    %101 = vector.broadcast %cst_38 : f32 to vector<8x8xf32>
    %102 = arith.mulf %100, %101 : vector<8x8xf32>
    %cst_39 = arith.constant dense<0xFF800000> : vector<8xf32>
    %103 = vector.multi_reduction <maximumf>, %102, %cst_39 [1] : vector<8x8xf32> to vector<8xf32>
    %104 = vector.shape_cast %103 : vector<8xf32> to vector<8x1xf32>
    %105 = vector.broadcast %104 : vector<8x1xf32> to vector<8x8xf32>
    %106 = arith.subf %102, %105 : vector<8x8xf32>
    %107 = math.exp %106 : vector<8x8xf32>
    %cst_40 = arith.constant dense<0.000000e+00> : vector<8xf32>
    %108 = vector.multi_reduction <add>, %107, %cst_40 [1] : vector<8x8xf32> to vector<8xf32>
    %109 = vector.shape_cast %108 : vector<8xf32> to vector<8x1xf32>
    %110 = tpu.reciprocal %109 : vector<8x1xf32> -> vector<8x1xf32>
    %111 = vector.broadcast %110 : vector<8x1xf32> to vector<8x8xf32>
    %112 = arith.mulf %107, %111 : vector<8x8xf32>
    %cst_41 = arith.constant dense<0.000000e+00> : vector<8x8xf32>
    %113 = tpu.matmul %112, %99, %cst_41 {dimension_numbers = #tpu.dot_dimension_numbers<[1], [0], [0], [1], [0, 0, 1, 1], [], []>} : vector<8x8xf32>, vector<8x8xf32>, vector<8x8xf32> -> vector<8x8xf32>
    %c8_42 = arith.constant 8 : index
    %c0_43 = arith.constant 0 : index
    %114 = vector.load %arg11[%c8_42, %c0_43] : memref<16x32xf32, #tpu.memory_space<vmem>>, vector<8x8xf32>
    tpu.vector_store %arg11[%c8_42, %c0_43], %113 {strides = array<i32>} : memref<16x32xf32, #tpu.memory_space<vmem>>, vector<8x8xf32>,
    %115 = vector.extract_strided_slice %24 {offsets = [8, 8], sizes = [8, 8], strides = [1, 1]} : vector<16x96xf32> to vector<8x8xf32>
    %116 = vector.extract_strided_slice %24 {offsets = [8, 40], sizes = [8, 8], strides = [1, 1]} : vector<16x96xf32> to vector<8x8xf32>
    %117 = vector.extract_strided_slice %24 {offsets = [8, 72], sizes = [8, 8], strides = [1, 1]} : vector<16x96xf32> to vector<8x8xf32>
    %cst_44 = arith.constant dense<0.000000e+00> : vector<8x8xf32>
    %118 = tpu.matmul %115, %116, %cst_44 {dimension_numbers = #tpu.dot_dimension_numbers<[1], [1], [0], [0], [0, 0, 1, 0], [], []>} : vector<8x8xf32>, vector<8x8xf32>, vector<8x8xf32> -> vector<8x8xf32>
    %cst_45 = arith.constant 0.353553385 : f32
    %119 = vector.broadcast %cst_45 : f32 to vector<8x8xf32>
    %120 = arith.mulf %118, %119 : vector<8x8xf32>
    %cst_46 = arith.constant dense<0xFF800000> : vector<8xf32>
    %121 = vector.multi_reduction <maximumf>, %120, %cst_46 [1] : vector<8x8xf32> to vector<8xf32>
    %122 = vector.shape_cast %121 : vector<8xf32> to vector<8x1xf32>
    %123 = vector.broadcast %122 : vector<8x1xf32> to vector<8x8xf32>
    %124 = arith.subf %120, %123 : vector<8x8xf32>
    %125 = math.exp %124 : vector<8x8xf32>
    %cst_47 = arith.constant dense<0.000000e+00> : vector<8xf32>
    %126 = vector.multi_reduction <add>, %125, %cst_47 [1] : vector<8x8xf32> to vector<8xf32>
    %127 = vector.shape_cast %126 : vector<8xf32> to vector<8x1xf32>
    %128 = tpu.reciprocal %127 : vector<8x1xf32> -> vector<8x1xf32>
    %129 = vector.broadcast %128 : vector<8x1xf32> to vector<8x8xf32>
    %130 = arith.mulf %125, %129 : vector<8x8xf32>
    %cst_48 = arith.constant dense<0.000000e+00> : vector<8x8xf32>
    %131 = tpu.matmul %130, %117, %cst_48 {dimension_numbers = #tpu.dot_dimension_numbers<[1], [0], [0], [1], [0, 0, 1, 1], [], []>} : vector<8x8xf32>, vector<8x8xf32>, vector<8x8xf32> -> vector<8x8xf32>
    %c8_49 = arith.constant 8 : index
    %c8_50 = arith.constant 8 : index
    %132 = vector.load %arg11[%c8_49, %c8_50] : memref<16x32xf32, #tpu.memory_space<vmem>>, vector<8x8xf32>
    tpu.vector_store %arg11[%c8_49, %c8_50], %131 {strides = array<i32>} : memref<16x32xf32, #tpu.memory_space<vmem>>, vector<8x8xf32>,
    %133 = vector.extract_strided_slice %24 {offsets = [8, 16], sizes = [8, 8], strides = [1, 1]} : vector<16x96xf32> to vector<8x8xf32>
    %134 = vector.extract_strided_slice %24 {offsets = [8, 48], sizes = [8, 8], strides = [1, 1]} : vector<16x96xf32> to vector<8x8xf32>
    %135 = vector.extract_strided_slice %24 {offsets = [8, 80], sizes = [8, 8], strides = [1, 1]} : vector<16x96xf32> to vector<8x8xf32>
    %cst_51 = arith.constant dense<0.000000e+00> : vector<8x8xf32>
    %136 = tpu.matmul %133, %134, %cst_51 {dimension_numbers = #tpu.dot_dimension_numbers<[1], [1], [0], [0], [0, 0, 1, 0], [], []>} : vector<8x8xf32>, vector<8x8xf32>, vector<8x8xf32> -> vector<8x8xf32>
    %cst_52 = arith.constant 0.353553385 : f32
    %137 = vector.broadcast %cst_52 : f32 to vector<8x8xf32>
    %138 = arith.mulf %136, %137 : vector<8x8xf32>
    %cst_53 = arith.constant dense<0xFF800000> : vector<8xf32>
    %139 = vector.multi_reduction <maximumf>, %138, %cst_53 [1] : vector<8x8xf32> to vector<8xf32>
    %140 = vector.shape_cast %139 : vector<8xf32> to vector<8x1xf32>
    %141 = vector.broadcast %140 : vector<8x1xf32> to vector<8x8xf32>
    %142 = arith.subf %138, %141 : vector<8x8xf32>
    %143 = math.exp %142 : vector<8x8xf32>
    %cst_54 = arith.constant dense<0.000000e+00> : vector<8xf32>
    %144 = vector.multi_reduction <add>, %143, %cst_54 [1] : vector<8x8xf32> to vector<8xf32>
    %145 = vector.shape_cast %144 : vector<8xf32> to vector<8x1xf32>
    %146 = tpu.reciprocal %145 : vector<8x1xf32> -> vector<8x1xf32>
    %147 = vector.broadcast %146 : vector<8x1xf32> to vector<8x8xf32>
    %148 = arith.mulf %143, %147 : vector<8x8xf32>
    %cst_55 = arith.constant dense<0.000000e+00> : vector<8x8xf32>
    %149 = tpu.matmul %148, %135, %cst_55 {dimension_numbers = #tpu.dot_dimension_numbers<[1], [0], [0], [1], [0, 0, 1, 1], [], []>} : vector<8x8xf32>, vector<8x8xf32>, vector<8x8xf32> -> vector<8x8xf32>
    %c8_56 = arith.constant 8 : index
    %c16_57 = arith.constant 16 : index
    %150 = vector.load %arg11[%c8_56, %c16_57] : memref<16x32xf32, #tpu.memory_space<vmem>>, vector<8x8xf32>
    tpu.vector_store %arg11[%c8_56, %c16_57], %149 {strides = array<i32>} : memref<16x32xf32, #tpu.memory_space<vmem>>, vector<8x8xf32>,
    %151 = vector.extract_strided_slice %24 {offsets = [8, 24], sizes = [8, 8], strides = [1, 1]} : vector<16x96xf32> to vector<8x8xf32>
    %152 = vector.extract_strided_slice %24 {offsets = [8, 56], sizes = [8, 8], strides = [1, 1]} : vector<16x96xf32> to vector<8x8xf32>
    %153 = vector.extract_strided_slice %24 {offsets = [8, 88], sizes = [8, 8], strides = [1, 1]} : vector<16x96xf32> to vector<8x8xf32>
    %cst_58 = arith.constant dense<0.000000e+00> : vector<8x8xf32>
    %154 = tpu.matmul %151, %152, %cst_58 {dimension_numbers = #tpu.dot_dimension_numbers<[1], [1], [0], [0], [0, 0, 1, 0], [], []>} : vector<8x8xf32>, vector<8x8xf32>, vector<8x8xf32> -> vector<8x8xf32>
    %cst_59 = arith.constant 0.353553385 : f32
    %155 = vector.broadcast %cst_59 : f32 to vector<8x8xf32>
    %156 = arith.mulf %154, %155 : vector<8x8xf32>
    %cst_60 = arith.constant dense<0xFF800000> : vector<8xf32>
    %157 = vector.multi_reduction <maximumf>, %156, %cst_60 [1] : vector<8x8xf32> to vector<8xf32>
    %158 = vector.shape_cast %157 : vector<8xf32> to vector<8x1xf32>
    %159 = vector.broadcast %158 : vector<8x1xf32> to vector<8x8xf32>
    %160 = arith.subf %156, %159 : vector<8x8xf32>
    %161 = math.exp %160 : vector<8x8xf32>
    %cst_61 = arith.constant dense<0.000000e+00> : vector<8xf32>
    %162 = vector.multi_reduction <add>, %161, %cst_61 [1] : vector<8x8xf32> to vector<8xf32>
    %163 = vector.shape_cast %162 : vector<8xf32> to vector<8x1xf32>
    %164 = tpu.reciprocal %163 : vector<8x1xf32> -> vector<8x1xf32>
    %165 = vector.broadcast %164 : vector<8x1xf32> to vector<8x8xf32>
    %166 = arith.mulf %161, %165 : vector<8x8xf32>
    %cst_62 = arith.constant dense<0.000000e+00> : vector<8x8xf32>
    %167 = tpu.matmul %166, %153, %cst_62 {dimension_numbers = #tpu.dot_dimension_numbers<[1], [0], [0], [1], [0, 0, 1, 1], [], []>} : vector<8x8xf32>, vector<8x8xf32>, vector<8x8xf32> -> vector<8x8xf32>
    %c8_63 = arith.constant 8 : index
    %c24_64 = arith.constant 24 : index
    %168 = vector.load %arg11[%c8_63, %c24_64] : memref<16x32xf32, #tpu.memory_space<vmem>>, vector<8x8xf32>
    tpu.vector_store %arg11[%c8_63, %c24_64], %167 {strides = array<i32>} : memref<16x32xf32, #tpu.memory_space<vmem>>, vector<8x8xf32>,
    %c0_65 = arith.constant 0 : index
    %c0_66 = arith.constant 0 : index
    %169 = vector.load %arg11[%c0_65, %c0_66] : memref<16x32xf32, #tpu.memory_space<vmem>>, vector<16x32xf32>
    %c0_67 = arith.constant 0 : index
    %c0_68 = arith.constant 0 : index
    %170 = vector.load %arg4[%c0_67, %c0_68] : memref<32x32xf32, #tpu.memory_space<vmem>>, vector<32x32xf32>
    %cst_69 = arith.constant dense<0.000000e+00> : vector<16x32xf32>
    %171 = tpu.matmul %169, %170, %cst_69 {dimension_numbers = #tpu.dot_dimension_numbers<[1], [0], [0], [1], [0, 0, 1, 1], [], []>} : vector<16x32xf32>, vector<32x32xf32>, vector<16x32xf32> -> vector<16x32xf32>
    %c0_70 = arith.constant 0 : index
    %c0_71 = arith.constant 0 : index
    %172 = vector.load %arg5[%c0_70, %c0_71] : memref<1x32xf32, #tpu.memory_space<vmem>>, vector<1x32xf32>
    %173 = vector.broadcast %172 : vector<1x32xf32> to vector<16x32xf32>
    %174 = arith.addf %171, %173 : vector<16x32xf32>
    %175 = arith.addf %0, %174 : vector<16x32xf32>
    %cst_72 = arith.constant dense<0.000000e+00> : vector<16xf32>
    %176 = vector.multi_reduction <add>, %175, %cst_72 [1] : vector<16x32xf32> to vector<16xf32>
    %177 = vector.shape_cast %176 : vector<16xf32> to vector<16x1xf32>
    %cst_73 = arith.constant 3.200000e+01 : f32
    %178 = vector.broadcast %cst_73 : f32 to vector<16x1xf32>
    %179 = arith.divf %177, %178 : vector<16x1xf32>
    %180 = vector.broadcast %179 : vector<16x1xf32> to vector<16x32xf32>
    %181 = arith.subf %175, %180 : vector<16x32xf32>
    %182 = arith.mulf %181, %181 : vector<16x32xf32>
    %cst_74 = arith.constant dense<0.000000e+00> : vector<16xf32>
    %183 = vector.multi_reduction <add>, %182, %cst_74 [1] : vector<16x32xf32> to vector<16xf32>
    %184 = vector.shape_cast %183 : vector<16xf32> to vector<16x1xf32>
    %cst_75 = arith.constant 3.200000e+01 : f32
    %185 = vector.broadcast %cst_75 : f32 to vector<16x1xf32>
    %186 = arith.divf %184, %185 : vector<16x1xf32>
    %cst_76 = arith.constant 9.99999974E-6 : f32
    %187 = vector.broadcast %cst_76 : f32 to vector<16x1xf32>
    %188 = arith.addf %186, %187 : vector<16x1xf32>
    %189 = math.rsqrt %188 : vector<16x1xf32>
    %190 = vector.broadcast %189 : vector<16x1xf32> to vector<16x32xf32>
    %191 = arith.mulf %181, %190 : vector<16x32xf32>
    %192 = vector.broadcast %1 : vector<1x32xf32> to vector<16x32xf32>
    %193 = arith.mulf %191, %192 : vector<16x32xf32>
    %194 = vector.broadcast %2 : vector<1x32xf32> to vector<16x32xf32>
    %195 = arith.addf %193, %194 : vector<16x32xf32>
    %c0_77 = arith.constant 0 : index
    %c0_78 = arith.constant 0 : index
    %196 = vector.load %arg6[%c0_77, %c0_78] : memref<32x128xf32, #tpu.memory_space<vmem>>, vector<32x128xf32>
    %cst_79 = arith.constant dense<0.000000e+00> : vector<16x128xf32>
    %197 = tpu.matmul %195, %196, %cst_79 {dimension_numbers = #tpu.dot_dimension_numbers<[1], [0], [0], [1], [0, 0, 1, 1], [], []>} : vector<16x32xf32>, vector<32x128xf32>, vector<16x128xf32> -> vector<16x128xf32>
    %c0_80 = arith.constant 0 : index
    %c0_81 = arith.constant 0 : index
    %198 = vector.load %arg7[%c0_80, %c0_81] : memref<1x128xf32, #tpu.memory_space<vmem>>, vector<1x128xf32>
    %199 = vector.broadcast %198 : vector<1x128xf32> to vector<16x128xf32>
    %200 = arith.addf %197, %199 : vector<16x128xf32>
    %cst_82 = arith.constant 5.000000e-01 : f32
    %201 = vector.broadcast %cst_82 : f32 to vector<16x128xf32>
    %202 = arith.mulf %201, %200 : vector<16x128xf32>
    %cst_83 = arith.constant 0.707106769 : f32
    %203 = vector.broadcast %cst_83 : f32 to vector<16x128xf32>
    %204 = arith.mulf %200, %203 : vector<16x128xf32>
    %205 = math.erf %204 : vector<16x128xf32>
    %cst_84 = arith.constant 1.000000e+00 : f32
    %206 = vector.broadcast %cst_84 : f32 to vector<16x128xf32>
    %207 = arith.addf %206, %205 : vector<16x128xf32>
    %208 = arith.mulf %202, %207 : vector<16x128xf32>
    %c0_85 = arith.constant 0 : index
    %c0_86 = arith.constant 0 : index
    %209 = vector.load %arg8[%c0_85, %c0_86] : memref<128x32xf32, #tpu.memory_space<vmem>>, vector<128x32xf32>
    %cst_87 = arith.constant dense<0.000000e+00> : vector<16x32xf32>
    %210 = tpu.matmul %208, %209, %cst_87 {dimension_numbers = #tpu.dot_dimension_numbers<[1], [0], [0], [1], [0, 0, 1, 1], [], []>} : vector<16x128xf32>, vector<128x32xf32>, vector<16x32xf32> -> vector<16x32xf32>
    %c0_88 = arith.constant 0 : index
    %c0_89 = arith.constant 0 : index
    %211 = vector.load %arg9[%c0_88, %c0_89] : memref<1x32xf32, #tpu.memory_space<vmem>>, vector<1x32xf32>
    %212 = vector.broadcast %211 : vector<1x32xf32> to vector<16x32xf32>
    %213 = arith.addf %210, %212 : vector<16x32xf32>
    %214 = arith.addf %175, %213 : vector<16x32xf32>
    %c0_90 = arith.constant 0 : index
    %c0_91 = arith.constant 0 : index
    %215 = vector.load %arg10[%c0_90, %c0_91] : memref<16x32xf32, #tpu.memory_space<vmem>>, vector<16x32xf32>
    tpu.vector_store %arg10[%c0_90, %c0_91], %214 {strides = array<i32>} : memref<16x32xf32, #tpu.memory_space<vmem>>, vector<16x32xf32>,
    return
  }
}

</mosaic_0001>

<llo_original>
// kernel: encoder_block.1
$region0: #{encoder_block.1}
  #allocation0 [shape = 'u32[]', space=smem, size = 0x4, offset = 0x4, fixed_abs, tag = 'smem constant byte address 0x4 - core index']
  #allocation1 [shape = 'u32[144,128]{1,0:T(1,128)}', space=vmem, size = 0x12000, scoped, tag = 'internal scratch']
  #allocation2 [shape = 'f32[16,32]{1,0:T(8,128)}', space=vmem, size = 0x2000, scoped, tag = 'scratch operand']
  %s0 = inlined_call_operand.vmem [shape: f32[16,32], index: 0, kind: input, shape index: {}]
  %s1 = inlined_call_operand.vmem [shape: f32[1,32], index: 1, kind: input, shape index: {}]
  %s2 = inlined_call_operand.vmem [shape: f32[1,32], index: 2, kind: input, shape index: {}]
  %s3 = inlined_call_operand.vmem [shape: f32[32,96], index: 3, kind: input, shape index: {}]
  %s4 = inlined_call_operand.vmem [shape: f32[32,32], index: 4, kind: input, shape index: {}]
  %s5 = inlined_call_operand.vmem [shape: f32[1,32], index: 5, kind: input, shape index: {}]
  %s6 = inlined_call_operand.vmem [shape: f32[32,128], index: 6, kind: input, shape index: {}]
  %s7 = inlined_call_operand.vmem [shape: f32[1,128], index: 7, kind: input, shape index: {}]
  %s8 = inlined_call_operand.vmem [shape: f32[128,32], index: 8, kind: input, shape index: {}]
  %s9 = inlined_call_operand.vmem [shape: f32[1,32], index: 9, kind: input, shape index: {}]
  %s10 = inlined_call_operand.hbm [shape: f32[16,32], index: 10, kind: output, shape index: {}]
  %s11 = sld [smem:[#allocation0]]
  $region50: #{encoder_block.1} parent=0
    _
  %s13 = ssub.s32 1, %s11
  %s14 = scalar_select 0, %s13, %s11
  $region1: #{encoder_block.1} parent=0
    #allocation3 [shape = 'u8[8192]{0}', space=vmem, size = 0x2000, scoped, tag = 'output window, operand 0, single buffered']
    #allocation4 [shape = 's32[1]{0}', space=sflag, size = 0x4, scoped, tag = 'scoped memory for encoder_block.1']
    %15 = vsyncpa [#allocation4], 0
    // Predicated region
    $region2: #{encoder_block.1} parent=1 // pred_check
      _
    $region3: #{encoder_block.1} parent=1 // pred_check_branch
      %17 = sbr.rel (0) target = $region5
    $region4: #{encoder_block.1} parent=1 // pred_region
      _
    $region5: #{encoder_block.1} parent=1 // pred_fallthru
      _
    // Predicated region
    $region6: #{encoder_block.1} parent=1 // pred_check
      _
    $region7: #{encoder_block.1} parent=1 // pred_check_branch
      %19 = sbr.rel (0) target = $region9
    $region8: #{encoder_block.1} parent=1 // pred_region
      _
    $region9: #{encoder_block.1} parent=1 // pred_fallthru
      _
    // Predicated region
    $region10: #{encoder_block.1} parent=1 // pred_check
      _
    $region11: #{encoder_block.1} parent=1 // pred_check_branch
      %21 = sbr.rel (0) target = $region13
    $region12: #{encoder_block.1} parent=1 // pred_region
      _
    $region13: #{encoder_block.1} parent=1 // pred_fallthru
      _
    // Predicated region
    $region14: #{encoder_block.1} parent=1 // pred_check
      _
    $region15: #{encoder_block.1} parent=1 // pred_check_branch
      %23 = sbr.rel (0) target = $region17
    $region16: #{encoder_block.1} parent=1 // pred_region
      _
    $region17: #{encoder_block.1} parent=1 // pred_fallthru
      _
    // Predicated region
    $region18: #{encoder_block.1} parent=1 // pred_check
      _
    $region19: #{encoder_block.1} parent=1 // pred_check_branch
      %25 = sbr.rel (0) target = $region21
    $region20: #{encoder_block.1} parent=1 // pred_region
      _
    $region21: #{encoder_block.1} parent=1 // pred_fallthru
      _
    // Predicated region
    $region22: #{encoder_block.1} parent=1 // pred_check
      _
    $region23: #{encoder_block.1} parent=1 // pred_check_branch
      %27 = sbr.rel (0) target = $region25
    $region24: #{encoder_block.1} parent=1 // pred_region
      _
    $region25: #{encoder_block.1} parent=1 // pred_fallthru
      _
    // Predicated region
    $region26: #{encoder_block.1} parent=1 // pred_check
      _
    $region27: #{encoder_block.1} parent=1 // pred_check_branch
      %29 = sbr.rel (0) target = $region29
    $region28: #{encoder_block.1} parent=1 // pred_region
      _
    $region29: #{encoder_block.1} parent=1 // pred_fallthru
      _
    // Predicated region
    $region30: #{encoder_block.1} parent=1 // pred_check
      _
    $region31: #{encoder_block.1} parent=1 // pred_check_branch
      %31 = sbr.rel (0) target = $region33
    $region32: #{encoder_block.1} parent=1 // pred_region
      _
    $region33: #{encoder_block.1} parent=1 // pred_fallthru
      _
    // Predicated region
    $region34: #{encoder_block.1} parent=1 // pred_check
      _
    $region35: #{encoder_block.1} parent=1 // pred_check_branch
      %33 = sbr.rel (0) target = $region37
    $region36: #{encoder_block.1} parent=1 // pred_region
      _
    $region37: #{encoder_block.1} parent=1 // pred_fallthru
      _
    // Predicated region
    $region38: #{encoder_block.1} parent=1 // pred_check
      _
    $region39: #{encoder_block.1} parent=1 // pred_check_branch
      %35 = sbr.rel (0) target = $region41
    $region40: #{encoder_block.1} parent=1 // pred_region
      _
    $region41: #{encoder_block.1} parent=1 // pred_fallthru
      _
    %v36 = vld [vmem:[%s0] sm:$0xff]
    %v37 = vld [vmem:[%s0 + $0x8] sm:$0xff]
    %v38 = vld [vmem:[%s1] sm:$0x1]
    %v39 = vld [vmem:[%s2] sm:$0x1]
    %vm40 = vcmask 261120
    %v41 = vsel %vm40, %v36, 0.0
    %42 = vadd.xlane.f32.xlu0 %v41
    %v43 = vpop.xlane.xlu0 %42
    %v44 = vsel %vm40, %v37, 0.0
    %45 = vadd.xlane.f32.xlu0 %v44
    %v46 = vpop.xlane.xlu0 %45
    %v47 = vrcp.pop 32.0
    %v48 = vmul.f32 %v43, %v47
    %v49 = vmul.f32 %v46, %v47
    %v50 = vsub.f32 %v36, %v48
    %v51 = vsub.f32 %v37, %v49
    %v52 = vmul.f32 %v50, %v50
    %v53 = vmul.f32 %v51, %v51
    %v54 = vsel %vm40, %v52, 0.0
    %55 = vadd.xlane.f32.xlu0 %v54
    %v56 = vpop.xlane.xlu0 %55
    %v57 = vsel %vm40, %v53, 0.0
    %58 = vadd.xlane.f32.xlu0 %v57
    %v59 = vpop.xlane.xlu0 %58
    %v60 = vmul.f32 %v56, %v47
    %v61 = vmul.f32 %v59, %v47
    %v62 = vadd.f32 %v60, 1e-05
    %v63 = vadd.f32 %v61, 1e-05
    %v64 = vrsqrt.pop %v62
    %v65 = vrsqrt.pop %v63
    %v66 = vmul.f32 %v50, %v64
    %v67 = vmul.f32 %v51, %v65
    %v69 = vlaneseq
    %v70 = vshrl.u32 %v69, 7
    %v71 = vsub.s32 0, %v70
    %v72 = vrot.slane %v38, %v71
    %v74 = vmul.f32 %v66, %v72
    %v75 = vmul.f32 %v67, %v72
    %v77 = vlaneseq
    %v78 = vshrl.u32 %v77, 7
    %v79 = vsub.s32 0, %v78
    %v80 = vrot.slane %v39, %v79
    %v82 = vadd.f32 %v74, %v80
    %v83 = vadd.f32 %v75, %v80
    %v84 = vld [vmem:[%s3] sm:$0xff]
    %v85 = vld [vmem:[%s3 + $0x8] sm:$0xff]
    %v86 = vld [vmem:[%s3 + $0x10] sm:$0xff]
    %v87 = vld [vmem:[%s3 + $0x18] sm:$0xff]
    %v89 = vsel %vm40, %v82, 0
    %v92 = vsel %vm40, %v83, 0
    %94 = vmatprep.subr.mxu0 0.0
    %95 = vmatpush1.msra.mxu0 %v84
    %96 = vmatprep.subr.mxu0 0.0
    %97 = vmatpush1.msra.mxu0 %v85
    %98 = vmatprep.subr.mxu0 0.0
    %99 = vmatpush1.msra.mxu0 %v86
    %100 = vmatprep.subr.mxu0 0.0
    %101 = vmatpush1.msra.mxu0 %v87
    %102 = vmatprep.subr.mxu0 0.0
    %103 = vmatpush1.msra.mxu0 0.0
    %104 = vmatprep.subr.mxu0 0.0
    %105 = vmatpush1.msra.mxu0 0.0
    %106 = vmatprep.subr.mxu0 0.0
    %107 = vmatpush1.msra.mxu0 0.0
    %108 = vmatprep.subr.mxu0 0.0
    %109 = vmatpush1.msra.mxu0 0.0
    %110 = vmatprep.subr.mxu0 0.0
    %111 = vmatpush1.msra.mxu0 0.0
    %112 = vmatprep.subr.mxu0 0.0
    %113 = vmatpush1.msra.mxu0 0.0
    %114 = vmatprep.subr.mxu0 0.0
    %115 = vmatpush1.msra.mxu0 0.0
    %116 = vmatprep.subr.mxu0 0.0
    %117 = vmatpush1.msra.mxu0 0.0
    %118 = vmatprep.subr.mxu0 0.0
    %119 = vmatpush1.msra.mxu0 0.0
    %120 = vmatprep.subr.mxu0 0.0
    %121 = vmatpush1.msra.mxu0 0.0
    %122 = vmatprep.subr.mxu0 0.0
    %123 = vmatpush1.msra.mxu0 0.0
    %124 = vmatprep.subr.mxu0 0.0
    %125 = vmatpush1.msra.mxu0 0.0
    %126 = vmatprep.subr.mxu0 0.0
    %127 = vmatpush1.msra.mxu0 0.0
    %128 = vmatprep.subr.mxu0 0.0
    %129 = vmatpush1.msra.mxu0 0.0
    %130 = vmatprep.subr.mxu0 0.0
    %131 = vmatpush1.msra.mxu0 0.0
    %132 = vmatprep.subr.mxu0 0.0
    %133 = vmatpush1.msra.mxu0 0.0
    %134 = vmatprep.subr.mxu0 0.0
    %135 = vmatpush1.msra.mxu0 0.0
    %136 = vmatprep.subr.mxu0 0.0
    %137 = vmatpush1.msra.mxu0 0.0
    %138 = vmatprep.subr.mxu0 0.0
    %139 = vmatpush1.msra.mxu0 0.0
    %140 = vmatprep.subr.mxu0 0.0
    %141 = vmatpush1.msra.mxu0 0.0
    %142 = vmatprep.subr.mxu0 0.0
    %143 = vmatpush1.msra.mxu0 0.0
    %144 = vmatprep.subr.mxu0 0.0
    %145 = vmatpush1.msra.mxu0 0.0
    %146 = vmatprep.subr.mxu0 0.0
    %147 = vmatpush1.msra.mxu0 0.0
    %148 = vmatprep.subr.mxu0 0.0
    %149 = vmatpush1.msra.mxu0 0.0
    %150 = vmatprep.subr.mxu0 0.0
    %151 = vmatpush1.msra.mxu0 0.0
    %152 = vmatprep.subr.mxu0 0.0
    %153 = vmatpush1.msra.mxu0 0.0
    %154 = vmatprep.subr.mxu0 0.0
    %155 = vmatpush1.msra.mxu0 0.0
    %156 = vmatprep.subr.mxu0 0.0
    %157 = vmatpush1.msra.mxu0 0.0
    %158 = vmatprep.mubr.f32.mxu0 0.0
    %159 = vmatmul.mubr.f32.gmra.mrb[0].mxu0 %v89
    %v160 = vpop.f32.mrb[0].mxu0
    %v161 = vadd.f32 0.0, %v160
    %v162 = vpop.f32.mrb[0].mxu0
    %163 = vmatprep.mubr.f32.mxu0 0.0
    %164 = vmatmul.mubr.f32.gmra.mrb[0].mxu0 %v92
    %v165 = vpop.f32.mrb[0].mxu0
    %v166 = vadd.f32 0.0, %v165
    %v167 = vpop.f32.mrb[0].mxu0
    %168 = vdwg.mxu0
    %170 = vrot.lane.b32.xlu0 %v161, 96
    %v171 = vpop.permute.xlu0 %170
    %vm172 = vcmask 64512
    %v173 = vsel %vm172, %v161, 0
    %v175 = vsel %vm172, %v171, 0
    %177 = vmatprep.subr.mxu0 0.0
    %178 = vmatpush1.xpose.msra.mxu0 %v175
    %179 = vmatprep.subr.mxu0 0.0
    %180 = vmatpush1.xpose.msra.mxu0 0.0
    %181 = vmatprep.subr.mxu0 0.0
    %182 = vmatpush1.xpose.msra.mxu0 0.0
    %183 = vmatprep.subr.mxu0 0.0
    %184 = vmatpush1.xpose.msra.mxu0 0.0
    %185 = vmatprep.subr.mxu0 0.0
    %186 = vmatpush1.xpose.msra.mxu0 0.0
    %187 = vmatprep.subr.mxu0 0.0
    %188 = vmatpush1.xpose.msra.mxu0 0.0
    %189 = vmatprep.subr.mxu0 0.0
    %190 = vmatpush1.xpose.msra.mxu0 0.0
    %191 = vmatprep.subr.mxu0 0.0
    %192 = vmatpush1.xpose.msra.mxu0 0.0
    %193 = vmatprep.subr.mxu0 0.0
    %194 = vmatpush1.xpose.msra.mxu0 0.0
    %195 = vmatprep.subr.mxu0 0.0
    %196 = vmatpush1.xpose.msra.mxu0 0.0
    %197 = vmatprep.subr.mxu0 0.0
    %198 = vmatpush1.xpose.msra.mxu0 0.0
    %199 = vmatprep.subr.mxu0 0.0
    %200 = vmatpush1.xpose.msra.mxu0 0.0
    %201 = vmatprep.subr.mxu0 0.0
    %202 = vmatpush1.xpose.msra.mxu0 0.0
    %203 = vmatprep.subr.mxu0 0.0
    %204 = vmatpush1.xpose.msra.mxu0 0.0
    %205 = vmatprep.subr.mxu0 0.0
    %206 = vmatpush1.xpose.msra.mxu0 0.0
    %207 = vmatprep.subr.mxu0 0.0
    %208 = vmatpush1.xpose.msra.mxu0 0.0
    %209 = vmatprep.subr.mxu0 0.0
    %210 = vmatpush1.xpose.msra.mxu0 0.0
    %211 = vmatprep.subr.mxu0 0.0
    %212 = vmatpush1.xpose.msra.mxu0 0.0
    %213 = vmatprep.subr.mxu0 0.0
    %214 = vmatpush1.xpose.msra.mxu0 0.0
    %215 = vmatprep.subr.mxu0 0.0
    %216 = vmatpush1.xpose.msra.mxu0 0.0
    %217 = vmatprep.subr.mxu0 0.0
    %218 = vmatpush1.xpose.msra.mxu0 0.0
    %219 = vmatprep.subr.mxu0 0.0
    %220 = vmatpush1.xpose.msra.mxu0 0.0
    %221 = vmatprep.subr.mxu0 0.0
    %222 = vmatpush1.xpose.msra.mxu0 0.0
    %223 = vmatprep.subr.mxu0 0.0
    %224 = vmatpush1.xpose.msra.mxu0 0.0
    %225 = vmatprep.subr.mxu0 0.0
    %226 = vmatpush1.xpose.msra.mxu0 0.0
    %227 = vmatprep.subr.mxu0 0.0
    %228 = vmatpush1.xpose.msra.mxu0 0.0
    %229 = vmatprep.subr.mxu0 0.0
    %230 = vmatpush1.xpose.msra.mxu0 0.0
    %231 = vmatprep.subr.mxu0 0.0
    %232 = vmatpush1.xpose.msra.mxu0 0.0
    %233 = vmatprep.subr.mxu0 0.0
    %234 = vmatpush1.xpose.msra.mxu0 0.0
    %235 = vmatprep.subr.mxu0 0.0
    %236 = vmatpush1.xpose.msra.mxu0 0.0
    %237 = vmatprep.subr.mxu0 0.0
    %238 = vmatpush1.xpose.msra.mxu0 0.0
    %239 = vmatprep.subr.mxu0 0.0
    %240 = vmatpush1.xpose.msra.mxu0 0.0
    %241 = vmatprep.mubr.f32.mxu0 0.0
    %242 = vmatmul.mubr.f32.gmra.mrb[0].mxu0 %v173
    %v243 = vpop.f32.mrb[0].mxu0
    %v244 = vadd.f32 0.0, %v243
    %v245 = vpop.f32.mrb[0].mxu0
    %246 = vdwg.mxu0
    %v247 = vmul.f32 %v244, 0.35355338
    %v248 = vsel %vm172, %v247, -inf
    %249 = vmax.xlane.f32.xlu0 %v248
    %v250 = vpop.xlane.xlu0 %249
    %v251 = vsub.f32 %v247, %v250
    %v252 = vmul.f32 %v251, 1.442695
    %v253 = vpow.pop %v252
    %v254 = vsel %vm172, %v253, 0.0
    %255 = vadd.xlane.f32.xlu0 %v254
    %v256 = vpop.xlane.xlu0 %255
    %v257 = vrcp.pop %v256
    %v258 = vmul.f32 %v253, %v257
    %259 = vrot.lane.b32.xlu0 %v161, 64
    %v260 = vpop.permute.xlu0 %259
    %v263 = vsel %vm172, %v258, 0
    %265 = vmatprep.subr.mxu0 0.0
    %266 = vmatpush1.msra.mxu0 %v260
    %267 = vmatprep.subr.mxu0 0.0
    %268 = vmatpush1.msra.mxu0 0.0
    %269 = vmatprep.subr.mxu0 0.0
    %270 = vmatpush1.msra.mxu0 0.0
    %271 = vmatprep.subr.mxu0 0.0
    %272 = vmatpush1.msra.mxu0 0.0
    %273 = vmatprep.subr.mxu0 0.0
    %274 = vmatpush1.msra.mxu0 0.0
    %275 = vmatprep.subr.mxu0 0.0
    %276 = vmatpush1.msra.mxu0 0.0
    %277 = vmatprep.subr.mxu0 0.0
    %278 = vmatpush1.msra.mxu0 0.0
    %279 = vmatprep.subr.mxu0 0.0
    %280 = vmatpush1.msra.mxu0 0.0
    %281 = vmatprep.subr.mxu0 0.0
    %282 = vmatpush1.msra.mxu0 0.0
    %283 = vmatprep.subr.mxu0 0.0
    %284 = vmatpush1.msra.mxu0 0.0
    %285 = vmatprep.subr.mxu0 0.0
    %286 = vmatpush1.msra.mxu0 0.0
    %287 = vmatprep.subr.mxu0 0.0
    %288 = vmatpush1.msra.mxu0 0.0
    %289 = vmatprep.subr.mxu0 0.0
    %290 = vmatpush1.msra.mxu0 0.0
    %291 = vmatprep.subr.mxu0 0.0
    %292 = vmatpush1.msra.mxu0 0.0
    %293 = vmatprep.subr.mxu0 0.0
    %294 = vmatpush1.msra.mxu0 0.0
    %295 = vmatprep.subr.mxu0 0.0
    %296 = vmatpush1.msra.mxu0 0.0
    %297 = vmatprep.subr.mxu0 0.0
    %298 = vmatpush1.msra.mxu0 0.0
    %299 = vmatprep.subr.mxu0 0.0
    %300 = vmatpush1.msra.mxu0 0.0
    %301 = vmatprep.subr.mxu0 0.0
    %302 = vmatpush1.msra.mxu0 0.0
    %303 = vmatprep.subr.mxu0 0.0
    %304 = vmatpush1.msra.mxu0 0.0
    %305 = vmatprep.subr.mxu0 0.0
    %306 = vmatpush1.msra.mxu0 0.0
    %307 = vmatprep.subr.mxu0 0.0
    %308 = vmatpush1.msra.mxu0 0.0
    %309 = vmatprep.subr.mxu0 0.0
    %310 = vmatpush1.msra.mxu0 0.0
    %311 = vmatprep.subr.mxu0 0.0
    %312 = vmatpush1.msra.mxu0 0.0
    %313 = vmatprep.subr.mxu0 0.0
    %314 = vmatpush1.msra.mxu0 0.0
    %315 = vmatprep.subr.mxu0 0.0
    %316 = vmatpush1.msra.mxu0 0.0
    %317 = vmatprep.subr.mxu0 0.0
    %318 = vmatpush1.msra.mxu0 0.0
    %319 = vmatprep.subr.mxu0 0.0
    %320 = vmatpush1.msra.mxu0 0.0
    %321 = vmatprep.subr.mxu0 0.0
    %322 = vmatpush1.msra.mxu0 0.0
    %323 = vmatprep.subr.mxu0 0.0
    %324 = vmatpush1.msra.mxu0 0.0
    %325 = vmatprep.subr.mxu0 0.0
    %326 = vmatpush1.msra.mxu0 0.0
    %327 = vmatprep.subr.mxu0 0.0
    %328 = vmatpush1.msra.mxu0 0.0
    %329 = vmatprep.mubr.f32.mxu0 0.0
    %330 = vmatmul.mubr.f32.gmra.mrb[0].mxu0 %v263
    %v331 = vpop.f32.mrb[0].mxu0
    %v332 = vadd.f32 0.0, %v331
    %v333 = vpop.f32.mrb[0].mxu0
    %334 = vdwg.mxu0
    %335 = vst.msk [vmem:[#allocation2] sm:$0xff] %vm172, %v332
    %336 = vrot.lane.b32.xlu0 %v161, 120
    %v337 = vpop.permute.xlu0 %336
    %338 = vrot.lane.b32.xlu0 %v161, 88
    %v339 = vpop.permute.xlu0 %338
    %v340 = vsel %vm172, %v337, 0
    %v342 = vsel %vm172, %v339, 0
    %344 = vmatprep.subr.mxu0 0.0
    %345 = vmatpush1.xpose.msra.mxu0 %v342
    %346 = vmatprep.subr.mxu0 0.0
    %347 = vmatpush1.xpose.msra.mxu0 0.0
    %348 = vmatprep.subr.mxu0 0.0
    %349 = vmatpush1.xpose.msra.mxu0 0.0
    %350 = vmatprep.subr.mxu0 0.0
    %351 = vmatpush1.xpose.msra.mxu0 0.0
    %352 = vmatprep.subr.mxu0 0.0
    %353 = vmatpush1.xpose.msra.mxu0 0.0
    %354 = vmatprep.subr.mxu0 0.0
    %355 = vmatpush1.xpose.msra.mxu0 0.0
    %356 = vmatprep.subr.mxu0 0.0
    %357 = vmatpush1.xpose.msra.mxu0 0.0
    %358 = vmatprep.subr.mxu0 0.0
    %359 = vmatpush1.xpose.msra.mxu0 0.0
    %360 = vmatprep.subr.mxu0 0.0
    %361 = vmatpush1.xpose.msra.mxu0 0.0
    %362 = vmatprep.subr.mxu0 0.0
    %363 = vmatpush1.xpose.msra.mxu0 0.0
    %364 = vmatprep.subr.mxu0 0.0
    %365 = vmatpush1.xpose.msra.mxu0 0.0
    %366 = vmatprep.subr.mxu0 0.0
    %367 = vmatpush1.xpose.msra.mxu0 0.0
    %368 = vmatprep.subr.mxu0 0.0
    %369 = vmatpush1.xpose.msra.mxu0 0.0
    %370 = vmatprep.subr.mxu0 0.0
    %371 = vmatpush1.xpose.msra.mxu0 0.0
    %372 = vmatprep.subr.mxu0 0.0
    %373 = vmatpush1.xpose.msra.mxu0 0.0
    %374 = vmatprep.subr.mxu0 0.0
    %375 = vmatpush1.xpose.msra.mxu0 0.0
    %376 = vmatprep.subr.mxu0 0.0
    %377 = vmatpush1.xpose.msra.mxu0 0.0
    %378 = vmatprep.subr.mxu0 0.0
    %379 = vmatpush1.xpose.msra.mxu0 0.0
    %380 = vmatprep.subr.mxu0 0.0
    %381 = vmatpush1.xpose.msra.mxu0 0.0
    %382 = vmatprep.subr.mxu0 0.0
    %383 = vmatpush1.xpose.msra.mxu0 0.0
    %384 = vmatprep.subr.mxu0 0.0
    %385 = vmatpush1.xpose.msra.mxu0 0.0
    %386 = vmatprep.subr.mxu0 0.0
    %387 = vmatpush1.xpose.msra.mxu0 0.0
    %388 = vmatprep.subr.mxu0 0.0
    %389 = vmatpush1.xpose.msra.mxu0 0.0
    %390 = vmatprep.subr.mxu0 0.0
    %391 = vmatpush1.xpose.msra.mxu0 0.0
    %392 = vmatprep.subr.mxu0 0.0
    %393 = vmatpush1.xpose.msra.mxu0 0.0
    %394 = vmatprep.subr.mxu0 0.0
    %395 = vmatpush1.xpose.msra.mxu0 0.0
    %396 = vmatprep.subr.mxu0 0.0
    %397 = vmatpush1.xpose.msra.mxu0 0.0
    %398 = vmatprep.subr.mxu0 0.0
    %399 = vmatpush1.xpose.msra.mxu0 0.0
    %400 = vmatprep.subr.mxu0 0.0
    %401 = vmatpush1.xpose.msra.mxu0 0.0
    %402 = vmatprep.subr.mxu0 0.0
    %403 = vmatpush1.xpose.msra.mxu0 0.0
    %404 = vmatprep.subr.mxu0 0.0
    %405 = vmatpush1.xpose.msra.mxu0 0.0
    %406 = vmatprep.subr.mxu0 0.0
    %407 = vmatpush1.xpose.msra.mxu0 0.0
    %408 = vmatprep.mubr.f32.mxu0 0.0
    %409 = vmatmul.mubr.f32.gmra.mrb[0].mxu0 %v340
    %v410 = vpop.f32.mrb[0].mxu0
    %v411 = vadd.f32 0.0, %v410
    %v412 = vpop.f32.mrb[0].mxu0
    %413 = vdwg.mxu0
    %v414 = vmul.f32 %v411, 0.35355338
    %v415 = vsel %vm172, %v414, -inf
    %416 = vmax.xlane.f32.xlu0 %v415
    %v417 = vpop.xlane.xlu0 %416
    %v418 = vsub.f32 %v414, %v417
    %v419 = vmul.f32 %v418, 1.442695
    %v420 = vpow.pop %v419
    %v421 = vsel %vm172, %v420, 0.0
    %422 = vadd.xlane.f32.xlu0 %v421
    %v423 = vpop.xlane.xlu0 %422
    %v424 = vrcp.pop %v423
    %v425 = vmul.f32 %v420, %v424
    %426 = vrot.lane.b32.xlu0 %v161, 56
    %v427 = vpop.permute.xlu0 %426
    %v430 = vsel %vm172, %v425, 0
    %432 = vmatprep.subr.mxu0 0.0
    %433 = vmatpush1.msra.mxu0 %v427
    %434 = vmatprep.subr.mxu0 0.0
    %435 = vmatpush1.msra.mxu0 0.0
    %436 = vmatprep.subr.mxu0 0.0
    %437 = vmatpush1.msra.mxu0 0.0
    %438 = vmatprep.subr.mxu0 0.0
    %439 = vmatpush1.msra.mxu0 0.0
    %440 = vmatprep.subr.mxu0 0.0
    %441 = vmatpush1.msra.mxu0 0.0
    %442 = vmatprep.subr.mxu0 0.0
    %443 = vmatpush1.msra.mxu0 0.0
    %444 = vmatprep.subr.mxu0 0.0
    %445 = vmatpush1.msra.mxu0 0.0
    %446 = vmatprep.subr.mxu0 0.0
    %447 = vmatpush1.msra.mxu0 0.0
    %448 = vmatprep.subr.mxu0 0.0
    %449 = vmatpush1.msra.mxu0 0.0
    %450 = vmatprep.subr.mxu0 0.0
    %451 = vmatpush1.msra.mxu0 0.0
    %452 = vmatprep.subr.mxu0 0.0
    %453 = vmatpush1.msra.mxu0 0.0
    %454 = vmatprep.subr.mxu0 0.0
    %455 = vmatpush1.msra.mxu0 0.0
    %456 = vmatprep.subr.mxu0 0.0
    %457 = vmatpush1.msra.mxu0 0.0
    %458 = vmatprep.subr.mxu0 0.0
    %459 = vmatpush1.msra.mxu0 0.0
    %460 = vmatprep.subr.mxu0 0.0
    %461 = vmatpush1.msra.mxu0 0.0
    %462 = vmatprep.subr.mxu0 0.0
    %463 = vmatpush1.msra.mxu0 0.0
    %464 = vmatprep.subr.mxu0 0.0
    %465 = vmatpush1.msra.mxu0 0.0
    %466 = vmatprep.subr.mxu0 0.0
    %467 = vmatpush1.msra.mxu0 0.0
    %468 = vmatprep.subr.mxu0 0.0
    %469 = vmatpush1.msra.mxu0 0.0
    %470 = vmatprep.subr.mxu0 0.0
    %471 = vmatpush1.msra.mxu0 0.0
    %472 = vmatprep.subr.mxu0 0.0
    %473 = vmatpush1.msra.mxu0 0.0
    %474 = vmatprep.subr.mxu0 0.0
    %475 = vmatpush1.msra.mxu0 0.0
    %476 = vmatprep.subr.mxu0 0.0
    %477 = vmatpush1.msra.mxu0 0.0
    %478 = vmatprep.subr.mxu0 0.0
    %479 = vmatpush1.msra.mxu0 0.0
    %480 = vmatprep.subr.mxu0 0.0
    %481 = vmatpush1.msra.mxu0 0.0
    %482 = vmatprep.subr.mxu0 0.0
    %483 = vmatpush1.msra.mxu0 0.0
    %484 = vmatprep.subr.mxu0 0.0
    %485 = vmatpush1.msra.mxu0 0.0
    %486 = vmatprep.subr.mxu0 0.0
    %487 = vmatpush1.msra.mxu0 0.0
    %488 = vmatprep.subr.mxu0 0.0
    %489 = vmatpush1.msra.mxu0 0.0
    %490 = vmatprep.subr.mxu0 0.0
    %491 = vmatpush1.msra.mxu0 0.0
    %492 = vmatprep.subr.mxu0 0.0
    %493 = vmatpush1.msra.mxu0 0.0
    %494 = vmatprep.subr.mxu0 0.0
    %495 = vmatpush1.msra.mxu0 0.0
    %496 = vmatprep.mubr.f32.mxu0 0.0
    %497 = vmatmul.mubr.f32.gmra.mrb[0].mxu0 %v430
    %v498 = vpop.f32.mrb[0].mxu0
    %v499 = vadd.f32 0.0, %v498
    %v500 = vpop.f32.mrb[0].mxu0
    %501 = vdwg.mxu0
    %503 = vrot.lane.b32.xlu0 %v499, 8
    %v504 = vpop.permute.xlu0 %503
    %vm506 = vcmask 130112
    %507 = vst.msk [vmem:[#allocation2] sm:$0xff] %vm506, %v504
    %508 = vrot.lane.b32.xlu0 %v161, 112
    %v509 = vpop.permute.xlu0 %508
    %510 = vrot.lane.b32.xlu0 %v161, 80
    %v511 = vpop.permute.xlu0 %510
    %v512 = vsel %vm172, %v509, 0
    %v514 = vsel %vm172, %v511, 0
    %516 = vmatprep.subr.mxu0 0.0
    %517 = vmatpush1.xpose.msra.mxu0 %v514
    %518 = vmatprep.subr.mxu0 0.0
    %519 = vmatpush1.xpose.msra.mxu0 0.0
    %520 = vmatprep.subr.mxu0 0.0
    %521 = vmatpush1.xpose.msra.mxu0 0.0
    %522 = vmatprep.subr.mxu0 0.0
    %523 = vmatpush1.xpose.msra.mxu0 0.0
    %524 = vmatprep.subr.mxu0 0.0
    %525 = vmatpush1.xpose.msra.mxu0 0.0
    %526 = vmatprep.subr.mxu0 0.0
    %527 = vmatpush1.xpose.msra.mxu0 0.0
    %528 = vmatprep.subr.mxu0 0.0
    %529 = vmatpush1.xpose.msra.mxu0 0.0
    %530 = vmatprep.subr.mxu0 0.0
    %531 = vmatpush1.xpose.msra.mxu0 0.0
    %532 = vmatprep.subr.mxu0 0.0
    %533 = vmatpush1.xpose.msra.mxu0 0.0
    %534 = vmatprep.subr.mxu0 0.0
    %535 = vmatpush1.xpose.msra.mxu0 0.0
    %536 = vmatprep.subr.mxu0 0.0
    %537 = vmatpush1.xpose.msra.mxu0 0.0
    %538 = vmatprep.subr.mxu0 0.0
    %539 = vmatpush1.xpose.msra.mxu0 0.0
    %540 = vmatprep.subr.mxu0 0.0
    %541 = vmatpush1.xpose.msra.mxu0 0.0
    %542 = vmatprep.subr.mxu0 0.0
    %543 = vmatpush1.xpose.msra.mxu0 0.0
    %544 = vmatprep.subr.mxu0 0.0
    %545 = vmatpush1.xpose.msra.mxu0 0.0
    %546 = vmatprep.subr.mxu0 0.0
    %547 = vmatpush1.xpose.msra.mxu0 0.0
    %548 = vmatprep.subr.mxu0 0.0
    %549 = vmatpush1.xpose.msra.mxu0 0.0
    %550 = vmatprep.subr.mxu0 0.0
    %551 = vmatpush1.xpose.msra.mxu0 0.0
    %552 = vmatprep.subr.mxu0 0.0
    %553 = vmatpush1.xpose.msra.mxu0 0.0
    %554 = vmatprep.subr.mxu0 0.0
    %555 = vmatpush1.xpose.msra.mxu0 0.0
    %556 = vmatprep.subr.mxu0 0.0
    %557 = vmatpush1.xpose.msra.mxu0 0.0
    %558 = vmatprep.subr.mxu0 0.0
    %559 = vmatpush1.xpose.msra.mxu0 0.0
    %560 = vmatprep.subr.mxu0 0.0
    %561 = vmatpush1.xpose.msra.mxu0 0.0
    %562 = vmatprep.subr.mxu0 0.0
    %563 = vmatpush1.xpose.msra.mxu0 0.0
    %564 = vmatprep.subr.mxu0 0.0
    %565 = vmatpush1.xpose.msra.mxu0 0.0
    %566 = vmatprep.subr.mxu0 0.0
    %567 = vmatpush1.xpose.msra.mxu0 0.0
    %568 = vmatprep.subr.mxu0 0.0
    %569 = vmatpush1.xpose.msra.mxu0 0.0
    %570 = vmatprep.subr.mxu0 0.0
    %571 = vmatpush1.xpose.msra.mxu0 0.0
    %572 = vmatprep.subr.mxu0 0.0
    %573 = vmatpush1.xpose.msra.mxu0 0.0
    %574 = vmatprep.subr.mxu0 0.0
    %575 = vmatpush1.xpose.msra.mxu0 0.0
    %576 = vmatprep.subr.mxu0 0.0
    %577 = vmatpush1.xpose.msra.mxu0 0.0
    %578 = vmatprep.subr.mxu0 0.0
    %579 = vmatpush1.xpose.msra.mxu0 0.0
    %580 = vmatprep.mubr.f32.mxu0 0.0
    %581 = vmatmul.mubr.f32.gmra.mrb[0].mxu0 %v512
    %v582 = vpop.f32.mrb[0].mxu0
    %v583 = vadd.f32 0.0, %v582
    %v584 = vpop.f32.mrb[0].mxu0
    %585 = vdwg.mxu0
    %v586 = vmul.f32 %v583, 0.35355338
    %v587 = vsel %vm172, %v586, -inf
    %588 = vmax.xlane.f32.xlu0 %v587
    %v589 = vpop.xlane.xlu0 %588
    %v590 = vsub.f32 %v586, %v589
    %v591 = vmul.f32 %v590, 1.442695
    %v592 = vpow.pop %v591
    %v593 = vsel %vm172, %v592, 0.0
    %594 = vadd.xlane.f32.xlu0 %v593
    %v595 = vpop.xlane.xlu0 %594
    %v596 = vrcp.pop %v595
    %v597 = vmul.f32 %v592, %v596
    %598 = vrot.lane.b32.xlu0 %v161, 48
    %v599 = vpop.permute.xlu0 %598
    %v602 = vsel %vm172, %v597, 0
    %604 = vmatprep.subr.mxu0 0.0
    %605 = vmatpush1.msra.mxu0 %v599
    %606 = vmatprep.subr.mxu0 0.0
    %607 = vmatpush1.msra.mxu0 0.0
    %608 = vmatprep.subr.mxu0 0.0
    %609 = vmatpush1.msra.mxu0 0.0
    %610 = vmatprep.subr.mxu0 0.0
    %611 = vmatpush1.msra.mxu0 0.0
    %612 = vmatprep.subr.mxu0 0.0
    %613 = vmatpush1.msra.mxu0 0.0
    %614 = vmatprep.subr.mxu0 0.0
    %615 = vmatpush1.msra.mxu0 0.0
    %616 = vmatprep.subr.mxu0 0.0
    %617 = vmatpush1.msra.mxu0 0.0
    %618 = vmatprep.subr.mxu0 0.0
    %619 = vmatpush1.msra.mxu0 0.0
    %620 = vmatprep.subr.mxu0 0.0
    %621 = vmatpush1.msra.mxu0 0.0
    %622 = vmatprep.subr.mxu0 0.0
    %623 = vmatpush1.msra.mxu0 0.0
    %624 = vmatprep.subr.mxu0 0.0
    %625 = vmatpush1.msra.mxu0 0.0
    %626 = vmatprep.subr.mxu0 0.0
    %627 = vmatpush1.msra.mxu0 0.0
    %628 = vmatprep.subr.mxu0 0.0
    %629 = vmatpush1.msra.mxu0 0.0
    %630 = vmatprep.subr.mxu0 0.0
    %631 = vmatpush1.msra.mxu0 0.0
    %632 = vmatprep.subr.mxu0 0.0
    %633 = vmatpush1.msra.mxu0 0.0
    %634 = vmatprep.subr.mxu0 0.0
    %635 = vmatpush1.msra.mxu0 0.0
    %636 = vmatprep.subr.mxu0 0.0
    %637 = vmatpush1.msra.mxu0 0.0
    %638 = vmatprep.subr.mxu0 0.0
    %639 = vmatpush1.msra.mxu0 0.0
    %640 = vmatprep.subr.mxu0 0.0
    %641 = vmatpush1.msra.mxu0 0.0
    %642 = vmatprep.subr.mxu0 0.0
    %643 = vmatpush1.msra.mxu0 0.0
    %644 = vmatprep.subr.mxu0 0.0
    %645 = vmatpush1.msra.mxu0 0.0
    %646 = vmatprep.subr.mxu0 0.0
    %647 = vmatpush1.msra.mxu0 0.0
    %648 = vmatprep.subr.mxu0 0.0
    %649 = vmatpush1.msra.mxu0 0.0
    %650 = vmatprep.subr.mxu0 0.0
    %651 = vmatpush1.msra.mxu0 0.0
    %652 = vmatprep.subr.mxu0 0.0
    %653 = vmatpush1.msra.mxu0 0.0
    %654 = vmatprep.subr.mxu0 0.0
    %655 = vmatpush1.msra.mxu0 0.0
    %656 = vmatprep.subr.mxu0 0.0
    %657 = vmatpush1.msra.mxu0 0.0
    %658 = vmatprep.subr.mxu0 0.0
    %659 = vmatpush1.msra.mxu0 0.0
    %660 = vmatprep.subr.mxu0 0.0
    %661 = vmatpush1.msra.mxu0 0.0
    %662 = vmatprep.subr.mxu0 0.0
    %663 = vmatpush1.msra.mxu0 0.0
    %664 = vmatprep.subr.mxu0 0.0
    %665 = vmatpush1.msra.mxu0 0.0
    %666 = vmatprep.subr.mxu0 0.0
    %667 = vmatpush1.msra.mxu0 0.0
    %668 = vmatprep.mubr.f32.mxu0 0.0
    %669 = vmatmul.mubr.f32.gmra.mrb[0].mxu0 %v602
    %v670 = vpop.f32.mrb[0].mxu0
    %v671 = vadd.f32 0.0, %v670
    %v672 = vpop.f32.mrb[0].mxu0
    %673 = vdwg.mxu0
    %675 = vrot.lane.b32.xlu0 %v671, 16
    %v676 = vpop.permute.xlu0 %675
    %vm678 = vcmask 195712
    %679 = vst.msk [vmem:[#allocation2] sm:$0xff] %vm678, %v676
    %680 = vrot.lane.b32.xlu0 %v161, 104
    %v681 = vpop.permute.xlu0 %680
    %682 = vrot.lane.b32.xlu0 %v161, 72
    %v683 = vpop.permute.xlu0 %682
    %v684 = vsel %vm172, %v681, 0
    %v686 = vsel %vm172, %v683, 0
    %688 = vmatprep.subr.mxu0 0.0
    %689 = vmatpush1.xpose.msra.mxu0 %v686
    %690 = vmatprep.subr.mxu0 0.0
    %691 = vmatpush1.xpose.msra.mxu0 0.0
    %692 = vmatprep.subr.mxu0 0.0
    %693 = vmatpush1.xpose.msra.mxu0 0.0
    %694 = vmatprep.subr.mxu0 0.0
    %695 = vmatpush1.xpose.msra.mxu0 0.0
    %696 = vmatprep.subr.mxu0 0.0
    %697 = vmatpush1.xpose.msra.mxu0 0.0
    %698 = vmatprep.subr.mxu0 0.0
    %699 = vmatpush1.xpose.msra.mxu0 0.0
    %700 = vmatprep.subr.mxu0 0.0
    %701 = vmatpush1.xpose.msra.mxu0 0.0
    %702 = vmatprep.subr.mxu0 0.0
    %703 = vmatpush1.xpose.msra.mxu0 0.0
    %704 = vmatprep.subr.mxu0 0.0
    %705 = vmatpush1.xpose.msra.mxu0 0.0
    %706 = vmatprep.subr.mxu0 0.0
    %707 = vmatpush1.xpose.msra.mxu0 0.0
    %708 = vmatprep.subr.mxu0 0.0
    %709 = vmatpush1.xpose.msra.mxu0 0.0
    %710 = vmatprep.subr.mxu0 0.0
    %711 = vmatpush1.xpose.msra.mxu0 0.0
    %712 = vmatprep.subr.mxu0 0.0
    %713 = vmatpush1.xpose.msra.mxu0 0.0
    %714 = vmatprep.subr.mxu0 0.0
    %715 = vmatpush1.xpose.msra.mxu0 0.0
    %716 = vmatprep.subr.mxu0 0.0
    %717 = vmatpush1.xpose.msra.mxu0 0.0
    %718 = vmatprep.subr.mxu0 0.0
    %719 = vmatpush1.xpose.msra.mxu0 0.0
    %720 = vmatprep.subr.mxu0 0.0
    %721 = vmatpush1.xpose.msra.mxu0 0.0
    %722 = vmatprep.subr.mxu0 0.0
    %723 = vmatpush1.xpose.msra.mxu0 0.0
    %724 = vmatprep.subr.mxu0 0.0
    %725 = vmatpush1.xpose.msra.mxu0 0.0
    %726 = vmatprep.subr.mxu0 0.0
    %727 = vmatpush1.xpose.msra.mxu0 0.0
    %728 = vmatprep.subr.mxu0 0.0
    %729 = vmatpush1.xpose.msra.mxu0 0.0
    %730 = vmatprep.subr.mxu0 0.0
    %731 = vmatpush1.xpose.msra.mxu0 0.0
    %732 = vmatprep.subr.mxu0 0.0
    %733 = vmatpush1.xpose.msra.mxu0 0.0
    %734 = vmatprep.subr.mxu0 0.0
    %735 = vmatpush1.xpose.msra.mxu0 0.0
    %736 = vmatprep.subr.mxu0 0.0
    %737 = vmatpush1.xpose.msra.mxu0 0.0
    %738 = vmatprep.subr.mxu0 0.0
    %739 = vmatpush1.xpose.msra.mxu0 0.0
    %740 = vmatprep.subr.mxu0 0.0
    %741 = vmatpush1.xpose.msra.mxu0 0.0
    %742 = vmatprep.subr.mxu0 0.0
    %743 = vmatpush1.xpose.msra.mxu0 0.0
    %744 = vmatprep.subr.mxu0 0.0
    %745 = vmatpush1.xpose.msra.mxu0 0.0
    %746 = vmatprep.subr.mxu0 0.0
    %747 = vmatpush1.xpose.msra.mxu0 0.0
    %748 = vmatprep.subr.mxu0 0.0
    %749 = vmatpush1.xpose.msra.mxu0 0.0
    %750 = vmatprep.subr.mxu0 0.0
    %751 = vmatpush1.xpose.msra.mxu0 0.0
    %752 = vmatprep.mubr.f32.mxu0 0.0
    %753 = vmatmul.mubr.f32.gmra.mrb[0].mxu0 %v684
    %v754 = vpop.f32.mrb[0].mxu0
    %v755 = vadd.f32 0.0, %v754
    %v756 = vpop.f32.mrb[0].mxu0
    %757 = vdwg.mxu0
    %v758 = vmul.f32 %v755, 0.35355338
    %v759 = vsel %vm172, %v758, -inf
    %760 = vmax.xlane.f32.xlu0 %v759
    %v761 = vpop.xlane.xlu0 %760
    %v762 = vsub.f32 %v758, %v761
    %v763 = vmul.f32 %v762, 1.442695
    %v764 = vpow.pop %v763
    %v765 = vsel %vm172, %v764, 0.0
    %766 = vadd.xlane.f32.xlu0 %v765
    %v767 = vpop.xlane.xlu0 %766
    %v768 = vrcp.pop %v767
    %v769 = vmul.f32 %v764, %v768
    %770 = vrot.lane.b32.xlu0 %v161, 40
    %v771 = vpop.permute.xlu0 %770
    %v774 = vsel %vm172, %v769, 0
    %776 = vmatprep.subr.mxu0 0.0
    %777 = vmatpush1.msra.mxu0 %v771
    %778 = vmatprep.subr.mxu0 0.0
    %779 = vmatpush1.msra.mxu0 0.0
    %780 = vmatprep.subr.mxu0 0.0
    %781 = vmatpush1.msra.mxu0 0.0
    %782 = vmatprep.subr.mxu0 0.0
    %783 = vmatpush1.msra.mxu0 0.0
    %784 = vmatprep.subr.mxu0 0.0
    %785 = vmatpush1.msra.mxu0 0.0
    %786 = vmatprep.subr.mxu0 0.0
    %787 = vmatpush1.msra.mxu0 0.0
    %788 = vmatprep.subr.mxu0 0.0
    %789 = vmatpush1.msra.mxu0 0.0
    %790 = vmatprep.subr.mxu0 0.0
    %791 = vmatpush1.msra.mxu0 0.0
    %792 = vmatprep.subr.mxu0 0.0
    %793 = vmatpush1.msra.mxu0 0.0
    %794 = vmatprep.subr.mxu0 0.0
    %795 = vmatpush1.msra.mxu0 0.0
    %796 = vmatprep.subr.mxu0 0.0
    %797 = vmatpush1.msra.mxu0 0.0
    %798 = vmatprep.subr.mxu0 0.0
    %799 = vmatpush1.msra.mxu0 0.0
    %800 = vmatprep.subr.mxu0 0.0
    %801 = vmatpush1.msra.mxu0 0.0
    %802 = vmatprep.subr.mxu0 0.0
    %803 = vmatpush1.msra.mxu0 0.0
    %804 = vmatprep.subr.mxu0 0.0
    %805 = vmatpush1.msra.mxu0 0.0
    %806 = vmatprep.subr.mxu0 0.0
    %807 = vmatpush1.msra.mxu0 0.0
    %808 = vmatprep.subr.mxu0 0.0
    %809 = vmatpush1.msra.mxu0 0.0
    %810 = vmatprep.subr.mxu0 0.0
    %811 = vmatpush1.msra.mxu0 0.0
    %812 = vmatprep.subr.mxu0 0.0
    %813 = vmatpush1.msra.mxu0 0.0
    %814 = vmatprep.subr.mxu0 0.0
    %815 = vmatpush1.msra.mxu0 0.0
    %816 = vmatprep.subr.mxu0 0.0
    %817 = vmatpush1.msra.mxu0 0.0
    %818 = vmatprep.subr.mxu0 0.0
    %819 = vmatpush1.msra.mxu0 0.0
    %820 = vmatprep.subr.mxu0 0.0
    %821 = vmatpush1.msra.mxu0 0.0
    %822 = vmatprep.subr.mxu0 0.0
    %823 = vmatpush1.msra.mxu0 0.0
    %824 = vmatprep.subr.mxu0 0.0
    %825 = vmatpush1.msra.mxu0 0.0
    %826 = vmatprep.subr.mxu0 0.0
    %827 = vmatpush1.msra.mxu0 0.0
    %828 = vmatprep.subr.mxu0 0.0
    %829 = vmatpush1.msra.mxu0 0.0
    %830 = vmatprep.subr.mxu0 0.0
    %831 = vmatpush1.msra.mxu0 0.0
    %832 = vmatprep.subr.mxu0 0.0
    %833 = vmatpush1.msra.mxu0 0.0
    %834 = vmatprep.subr.mxu0 0.0
    %835 = vmatpush1.msra.mxu0 0.0
    %836 = vmatprep.subr.mxu0 0.0
    %837 = vmatpush1.msra.mxu0 0.0
    %838 = vmatprep.subr.mxu0 0.0
    %839 = vmatpush1.msra.mxu0 0.0
    %840 = vmatprep.mubr.f32.mxu0 0.0
    %841 = vmatmul.mubr.f32.gmra.mrb[0].mxu0 %v774
    %v842 = vpop.f32.mrb[0].mxu0
    %v843 = vadd.f32 0.0, %v842
    %v844 = vpop.f32.mrb[0].mxu0
    %845 = vdwg.mxu0
    %847 = vrot.lane.b32.xlu0 %v843, 24
    %v848 = vpop.permute.xlu0 %847
    %vm850 = vcmask 261312
    %851 = vst.msk [vmem:[#allocation2] sm:$0xff] %vm850, %v848
    %853 = vrot.lane.b32.xlu0 %v166, 96
    %v854 = vpop.permute.xlu0 %853
    %v855 = vsel %vm172, %v166, 0
    %v857 = vsel %vm172, %v854, 0
    %859 = vmatprep.subr.mxu0 0.0
    %860 = vmatpush1.xpose.msra.mxu0 %v857
    %861 = vmatprep.subr.mxu0 0.0
    %862 = vmatpush1.xpose.msra.mxu0 0.0
    %863 = vmatprep.subr.mxu0 0.0
    %864 = vmatpush1.xpose.msra.mxu0 0.0
    %865 = vmatprep.subr.mxu0 0.0
    %866 = vmatpush1.xpose.msra.mxu0 0.0
    %867 = vmatprep.subr.mxu0 0.0
    %868 = vmatpush1.xpose.msra.mxu0 0.0
    %869 = vmatprep.subr.mxu0 0.0
    %870 = vmatpush1.xpose.msra.mxu0 0.0
    %871 = vmatprep.subr.mxu0 0.0
    %872 = vmatpush1.xpose.msra.mxu0 0.0
    %873 = vmatprep.subr.mxu0 0.0
    %874 = vmatpush1.xpose.msra.mxu0 0.0
    %875 = vmatprep.subr.mxu0 0.0
    %876 = vmatpush1.xpose.msra.mxu0 0.0
    %877 = vmatprep.subr.mxu0 0.0
    %878 = vmatpush1.xpose.msra.mxu0 0.0
    %879 = vmatprep.subr.mxu0 0.0
    %880 = vmatpush1.xpose.msra.mxu0 0.0
    %881 = vmatprep.subr.mxu0 0.0
    %882 = vmatpush1.xpose.msra.mxu0 0.0
    %883 = vmatprep.subr.mxu0 0.0
    %884 = vmatpush1.xpose.msra.mxu0 0.0
    %885 = vmatprep.subr.mxu0 0.0
    %886 = vmatpush1.xpose.msra.mxu0 0.0
    %887 = vmatprep.subr.mxu0 0.0
    %888 = vmatpush1.xpose.msra.mxu0 0.0
    %889 = vmatprep.subr.mxu0 0.0
    %890 = vmatpush1.xpose.msra.mxu0 0.0
    %891 = vmatprep.subr.mxu0 0.0
    %892 = vmatpush1.xpose.msra.mxu0 0.0
    %893 = vmatprep.subr.mxu0 0.0
    %894 = vmatpush1.xpose.msra.mxu0 0.0
    %895 = vmatprep.subr.mxu0 0.0
    %896 = vmatpush1.xpose.msra.mxu0 0.0
    %897 = vmatprep.subr.mxu0 0.0
    %898 = vmatpush1.xpose.msra.mxu0 0.0
    %899 = vmatprep.subr.mxu0 0.0
    %900 = vmatpush1.xpose.msra.mxu0 0.0
    %901 = vmatprep.subr.mxu0 0.0
    %902 = vmatpush1.xpose.msra.mxu0 0.0
    %903 = vmatprep.subr.mxu0 0.0
    %904 = vmatpush1.xpose.msra.mxu0 0.0
    %905 = vmatprep.subr.mxu0 0.0
    %906 = vmatpush1.xpose.msra.mxu0 0.0
    %907 = vmatprep.subr.mxu0 0.0
    %908 = vmatpush1.xpose.msra.mxu0 0.0
    %909 = vmatprep.subr.mxu0 0.0
    %910 = vmatpush1.xpose.msra.mxu0 0.0
    %911 = vmatprep.subr.mxu0 0.0
    %912 = vmatpush1.xpose.msra.mxu0 0.0
    %913 = vmatprep.subr.mxu0 0.0
    %914 = vmatpush1.xpose.msra.mxu0 0.0
    %915 = vmatprep.subr.mxu0 0.0
    %916 = vmatpush1.xpose.msra.mxu0 0.0
    %917 = vmatprep.subr.mxu0 0.0
    %918 = vmatpush1.xpose.msra.mxu0 0.0
    %919 = vmatprep.subr.mxu0 0.0
    %920 = vmatpush1.xpose.msra.mxu0 0.0
    %921 = vmatprep.subr.mxu0 0.0
    %922 = vmatpush1.xpose.msra.mxu0 0.0
    %923 = vmatprep.mubr.f32.mxu0 0.0
    %924 = vmatmul.mubr.f32.gmra.mrb[0].mxu0 %v855
    %v925 = vpop.f32.mrb[0].mxu0
    %v926 = vadd.f32 0.0, %v925
    %v927 = vpop.f32.mrb[0].mxu0
    %928 = vdwg.mxu0
    %v929 = vmul.f32 %v926, 0.35355338
    %v930 = vsel %vm172, %v929, -inf
    %931 = vmax.xlane.f32.xlu0 %v930
    %v932 = vpop.xlane.xlu0 %931
    %v933 = vsub.f32 %v929, %v932
    %v934 = vmul.f32 %v933, 1.442695
    %v935 = vpow.pop %v934
    %v936 = vsel %vm172, %v935, 0.0
    %937 = vadd.xlane.f32.xlu0 %v936
    %v938 = vpop.xlane.xlu0 %937
    %v939 = vrcp.pop %v938
    %v940 = vmul.f32 %v935, %v939
    %941 = vrot.lane.b32.xlu0 %v166, 64
    %v942 = vpop.permute.xlu0 %941
    %v945 = vsel %vm172, %v940, 0
    %947 = vmatprep.subr.mxu0 0.0
    %948 = vmatpush1.msra.mxu0 %v942
    %949 = vmatprep.subr.mxu0 0.0
    %950 = vmatpush1.msra.mxu0 0.0
    %951 = vmatprep.subr.mxu0 0.0
    %952 = vmatpush1.msra.mxu0 0.0
    %953 = vmatprep.subr.mxu0 0.0
    %954 = vmatpush1.msra.mxu0 0.0
    %955 = vmatprep.subr.mxu0 0.0
    %956 = vmatpush1.msra.mxu0 0.0
    %957 = vmatprep.subr.mxu0 0.0
    %958 = vmatpush1.msra.mxu0 0.0
    %959 = vmatprep.subr.mxu0 0.0
    %960 = vmatpush1.msra.mxu0 0.0
    %961 = vmatprep.subr.mxu0 0.0
    %962 = vmatpush1.msra.mxu0 0.0
    %963 = vmatprep.subr.mxu0 0.0
    %964 = vmatpush1.msra.mxu0 0.0
    %965 = vmatprep.subr.mxu0 0.0
    %966 = vmatpush1.msra.mxu0 0.0
    %967 = vmatprep.subr.mxu0 0.0
    %968 = vmatpush1.msra.mxu0 0.0
    %969 = vmatprep.subr.mxu0 0.0
    %970 = vmatpush1.msra.mxu0 0.0
    %971 = vmatprep.subr.mxu0 0.0
    %972 = vmatpush1.msra.mxu0 0.0
    %973 = vmatprep.subr.mxu0 0.0
    %974 = vmatpush1.msra.mxu0 0.0
    %975 = vmatprep.subr.mxu0 0.0
    %976 = vmatpush1.msra.mxu0 0.0
    %977 = vmatprep.subr.mxu0 0.0
    %978 = vmatpush1.msra.mxu0 0.0
    %979 = vmatprep.subr.mxu0 0.0
    %980 = vmatpush1.msra.mxu0 0.0
    %981 = vmatprep.subr.mxu0 0.0
    %982 = vmatpush1.msra.mxu0 0.0
    %983 = vmatprep.subr.mxu0 0.0
    %984 = vmatpush1.msra.mxu0 0.0
    %985 = vmatprep.subr.mxu0 0.0
    %986 = vmatpush1.msra.mxu0 0.0
    %987 = vmatprep.subr.mxu0 0.0
    %988 = vmatpush1.msra.mxu0 0.0
    %989 = vmatprep.subr.mxu0 0.0
    %990 = vmatpush1.msra.mxu0 0.0
    %991 = vmatprep.subr.mxu0 0.0
    %992 = vmatpush1.msra.mxu0 0.0
    %993 = vmatprep.subr.mxu0 0.0
    %994 = vmatpush1.msra.mxu0 0.0
    %995 = vmatprep.subr.mxu0 0.0
    %996 = vmatpush1.msra.mxu0 0.0
    %997 = vmatprep.subr.mxu0 0.0
    %998 = vmatpush1.msra.mxu0 0.0
    %999 = vmatprep.subr.mxu0 0.0
    %1000 = vmatpush1.msra.mxu0 0.0
    %1001 = vmatprep.subr.mxu0 0.0
    %1002 = vmatpush1.msra.mxu0 0.0
    %1003 = vmatprep.subr.mxu0 0.0
    %1004 = vmatpush1.msra.mxu0 0.0
    %1005 = vmatprep.subr.mxu0 0.0
    %1006 = vmatpush1.msra.mxu0 0.0
    %1007 = vmatprep.subr.mxu0 0.0
    %1008 = vmatpush1.msra.mxu0 0.0
    %1009 = vmatprep.subr.mxu0 0.0
    %1010 = vmatpush1.msra.mxu0 0.0
    %1011 = vmatprep.mubr.f32.mxu0 0.0
    %1012 = vmatmul.mubr.f32.gmra.mrb[0].mxu0 %v945
    %v1013 = vpop.f32.mrb[0].mxu0
    %v1014 = vadd.f32 0.0, %v1013
    %v1015 = vpop.f32.mrb[0].mxu0
    %1016 = vdwg.mxu0
    %1017 = vst.msk [vmem:[#allocation2 + $0x8] sm:$0xff] %vm172, %v1014
    %1018 = vrot.lane.b32.xlu0 %v166, 120
    %v1019 = vpop.permute.xlu0 %1018
    %1020 = vrot.lane.b32.xlu0 %v166, 88
    %v1021 = vpop.permute.xlu0 %1020
    %v1022 = vsel %vm172, %v1019, 0
    %v1024 = vsel %vm172, %v1021, 0
    %1026 = vmatprep.subr.mxu0 0.0
    %1027 = vmatpush1.xpose.msra.mxu0 %v1024
    %1028 = vmatprep.subr.mxu0 0.0
    %1029 = vmatpush1.xpose.msra.mxu0 0.0
    %1030 = vmatprep.subr.mxu0 0.0
    %1031 = vmatpush1.xpose.msra.mxu0 0.0
    %1032 = vmatprep.subr.mxu0 0.0
    %1033 = vmatpush1.xpose.msra.mxu0 0.0
    %1034 = vmatprep.subr.mxu0 0.0
    %1035 = vmatpush1.xpose.msra.mxu0 0.0
    %1036 = vmatprep.subr.mxu0 0.0
    %1037 = vmatpush1.xpose.msra.mxu0 0.0
    %1038 = vmatprep.subr.mxu0 0.0
    %1039 = vmatpush1.xpose.msra.mxu0 0.0
    %1040 = vmatprep.subr.mxu0 0.0
    %1041 = vmatpush1.xpose.msra.mxu0 0.0
    %1042 = vmatprep.subr.mxu0 0.0
    %1043 = vmatpush1.xpose.msra.mxu0 0.0
    %1044 = vmatprep.subr.mxu0 0.0
    %1045 = vmatpush1.xpose.msra.mxu0 0.0
    %1046 = vmatprep.subr.mxu0 0.0
    %1047 = vmatpush1.xpose.msra.mxu0 0.0
    %1048 = vmatprep.subr.mxu0 0.0
    %1049 = vmatpush1.xpose.msra.mxu0 0.0
    %1050 = vmatprep.subr.mxu0 0.0
    %1051 = vmatpush1.xpose.msra.mxu0 0.0
    %1052 = vmatprep.subr.mxu0 0.0
    %1053 = vmatpush1.xpose.msra.mxu0 0.0
    %1054 = vmatprep.subr.mxu0 0.0
    %1055 = vmatpush1.xpose.msra.mxu0 0.0
    %1056 = vmatprep.subr.mxu0 0.0
    %1057 = vmatpush1.xpose.msra.mxu0 0.0
    %1058 = vmatprep.subr.mxu0 0.0
    %1059 = vmatpush1.xpose.msra.mxu0 0.0
    %1060 = vmatprep.subr.mxu0 0.0
    %1061 = vmatpush1.xpose.msra.mxu0 0.0
    %1062 = vmatprep.subr.mxu0 0.0
    %1063 = vmatpush1.xpose.msra.mxu0 0.0
    %1064 = vmatprep.subr.mxu0 0.0
    %1065 = vmatpush1.xpose.msra.mxu0 0.0
    %1066 = vmatprep.subr.mxu0 0.0
    %1067 = vmatpush1.xpose.msra.mxu0 0.0
    %1068 = vmatprep.subr.mxu0 0.0
    %1069 = vmatpush1.xpose.msra.mxu0 0.0
    %1070 = vmatprep.subr.mxu0 0.0
    %1071 = vmatpush1.xpose.msra.mxu0 0.0
    %1072 = vmatprep.subr.mxu0 0.0
    %1073 = vmatpush1.xpose.msra.mxu0 0.0
    %1074 = vmatprep.subr.mxu0 0.0
    %1075 = vmatpush1.xpose.msra.mxu0 0.0
    %1076 = vmatprep.subr.mxu0 0.0
    %1077 = vmatpush1.xpose.msra.mxu0 0.0
    %1078 = vmatprep.subr.mxu0 0.0
    %1079 = vmatpush1.xpose.msra.mxu0 0.0
    %1080 = vmatprep.subr.mxu0 0.0
    %1081 = vmatpush1.xpose.msra.mxu0 0.0
    %1082 = vmatprep.subr.mxu0 0.0
    %1083 = vmatpush1.xpose.msra.mxu0 0.0
    %1084 = vmatprep.subr.mxu0 0.0
    %1085 = vmatpush1.xpose.msra.mxu0 0.0
    %1086 = vmatprep.subr.mxu0 0.0
    %1087 = vmatpush1.xpose.msra.mxu0 0.0
    %1088 = vmatprep.subr.mxu0 0.0
    %1089 = vmatpush1.xpose.msra.mxu0 0.0
    %1090 = vmatprep.mubr.f32.mxu0 0.0
    %1091 = vmatmul.mubr.f32.gmra.mrb[0].mxu0 %v1022
    %v1092 = vpop.f32.mrb[0].mxu0
    %v1093 = vadd.f32 0.0, %v1092
    %v1094 = vpop.f32.mrb[0].mxu0
    %1095 = vdwg.mxu0
    %v1096 = vmul.f32 %v1093, 0.35355338
    %v1097 = vsel %vm172, %v1096, -inf
    %1098 = vmax.xlane.f32.xlu0 %v1097
    %v1099 = vpop.xlane.xlu0 %1098
    %v1100 = vsub.f32 %v1096, %v1099
    %v1101 = vmul.f32 %v1100, 1.442695
    %v1102 = vpow.pop %v1101
    %v1103 = vsel %vm172, %v1102, 0.0
    %1104 = vadd.xlane.f32.xlu0 %v1103
    %v1105 = vpop.xlane.xlu0 %1104
    %v1106 = vrcp.pop %v1105
    %v1107 = vmul.f32 %v1102, %v1106
    %1108 = vrot.lane.b32.xlu0 %v166, 56
    %v1109 = vpop.permute.xlu0 %1108
    %v1112 = vsel %vm172, %v1107, 0
    %1114 = vmatprep.subr.mxu0 0.0
    %1115 = vmatpush1.msra.mxu0 %v1109
    %1116 = vmatprep.subr.mxu0 0.0
    %1117 = vmatpush1.msra.mxu0 0.0
    %1118 = vmatprep.subr.mxu0 0.0
    %1119 = vmatpush1.msra.mxu0 0.0
    %1120 = vmatprep.subr.mxu0 0.0
    %1121 = vmatpush1.msra.mxu0 0.0
    %1122 = vmatprep.subr.mxu0 0.0
    %1123 = vmatpush1.msra.mxu0 0.0
    %1124 = vmatprep.subr.mxu0 0.0
    %1125 = vmatpush1.msra.mxu0 0.0
    %1126 = vmatprep.subr.mxu0 0.0
    %1127 = vmatpush1.msra.mxu0 0.0
    %1128 = vmatprep.subr.mxu0 0.0
    %1129 = vmatpush1.msra.mxu0 0.0
    %1130 = vmatprep.subr.mxu0 0.0
    %1131 = vmatpush1.msra.mxu0 0.0
    %1132 = vmatprep.subr.mxu0 0.0
    %1133 = vmatpush1.msra.mxu0 0.0
    %1134 = vmatprep.subr.mxu0 0.0
    %1135 = vmatpush1.msra.mxu0 0.0
    %1136 = vmatprep.subr.mxu0 0.0
    %1137 = vmatpush1.msra.mxu0 0.0
    %1138 = vmatprep.subr.mxu0 0.0
    %1139 = vmatpush1.msra.mxu0 0.0
    %1140 = vmatprep.subr.mxu0 0.0
    %1141 = vmatpush1.msra.mxu0 0.0
    %1142 = vmatprep.subr.mxu0 0.0
    %1143 = vmatpush1.msra.mxu0 0.0
    %1144 = vmatprep.subr.mxu0 0.0
    %1145 = vmatpush1.msra.mxu0 0.0
    %1146 = vmatprep.subr.mxu0 0.0
    %1147 = vmatpush1.msra.mxu0 0.0
    %1148 = vmatprep.subr.mxu0 0.0
    %1149 = vmatpush1.msra.mxu0 0.0
    %1150 = vmatprep.subr.mxu0 0.0
    %1151 = vmatpush1.msra.mxu0 0.0
    %1152 = vmatprep.subr.mxu0 0.0
    %1153 = vmatpush1.msra.mxu0 0.0
    %1154 = vmatprep.subr.mxu0 0.0
    %1155 = vmatpush1.msra.mxu0 0.0
    %1156 = vmatprep.subr.mxu0 0.0
    %1157 = vmatpush1.msra.mxu0 0.0
    %1158 = vmatprep.subr.mxu0 0.0
    %1159 = vmatpush1.msra.mxu0 0.0
    %1160 = vmatprep.subr.mxu0 0.0
    %1161 = vmatpush1.msra.mxu0 0.0
    %1162 = vmatprep.subr.mxu0 0.0
    %1163 = vmatpush1.msra.mxu0 0.0
    %1164 = vmatprep.subr.mxu0 0.0
    %1165 = vmatpush1.msra.mxu0 0.0
    %1166 = vmatprep.subr.mxu0 0.0
    %1167 = vmatpush1.msra.mxu0 0.0
    %1168 = vmatprep.subr.mxu0 0.0
    %1169 = vmatpush1.msra.mxu0 0.0
    %1170 = vmatprep.subr.mxu0 0.0
    %1171 = vmatpush1.msra.mxu0 0.0
    %1172 = vmatprep.subr.mxu0 0.0
    %1173 = vmatpush1.msra.mxu0 0.0
    %1174 = vmatprep.subr.mxu0 0.0
    %1175 = vmatpush1.msra.mxu0 0.0
    %1176 = vmatprep.subr.mxu0 0.0
    %1177 = vmatpush1.msra.mxu0 0.0
    %1178 = vmatprep.mubr.f32.mxu0 0.0
    %1179 = vmatmul.mubr.f32.gmra.mrb[0].mxu0 %v1112
    %v1180 = vpop.f32.mrb[0].mxu0
    %v1181 = vadd.f32 0.0, %v1180
    %v1182 = vpop.f32.mrb[0].mxu0
    %1183 = vdwg.mxu0
    %1185 = vrot.lane.b32.xlu0 %v1181, 8
    %v1186 = vpop.permute.xlu0 %1185
    %1188 = vst.msk [vmem:[#allocation2 + $0x8] sm:$0xff] %vm506, %v1186
    %1189 = vrot.lane.b32.xlu0 %v166, 112
    %v1190 = vpop.permute.xlu0 %1189
    %1191 = vrot.lane.b32.xlu0 %v166, 80
    %v1192 = vpop.permute.xlu0 %1191
    %v1193 = vsel %vm172, %v1190, 0
    %v1195 = vsel %vm172, %v1192, 0
    %1197 = vmatprep.subr.mxu0 0.0
    %1198 = vmatpush1.xpose.msra.mxu0 %v1195
    %1199 = vmatprep.subr.mxu0 0.0
    %1200 = vmatpush1.xpose.msra.mxu0 0.0
    %1201 = vmatprep.subr.mxu0 0.0
    %1202 = vmatpush1.xpose.msra.mxu0 0.0
    %1203 = vmatprep.subr.mxu0 0.0
    %1204 = vmatpush1.xpose.msra.mxu0 0.0
    %1205 = vmatprep.subr.mxu0 0.0
    %1206 = vmatpush1.xpose.msra.mxu0 0.0
    %1207 = vmatprep.subr.mxu0 0.0
    %1208 = vmatpush1.xpose.msra.mxu0 0.0
    %1209 = vmatprep.subr.mxu0 0.0
    %1210 = vmatpush1.xpose.msra.mxu0 0.0
    %1211 = vmatprep.subr.mxu0 0.0
    %1212 = vmatpush1.xpose.msra.mxu0 0.0
    %1213 = vmatprep.subr.mxu0 0.0
    %1214 = vmatpush1.xpose.msra.mxu0 0.0
    %1215 = vmatprep.subr.mxu0 0.0
    %1216 = vmatpush1.xpose.msra.mxu0 0.0
    %1217 = vmatprep.subr.mxu0 0.0
    %1218 = vmatpush1.xpose.msra.mxu0 0.0
    %1219 = vmatprep.subr.mxu0 0.0
    %1220 = vmatpush1.xpose.msra.mxu0 0.0
    %1221 = vmatprep.subr.mxu0 0.0
    %1222 = vmatpush1.xpose.msra.mxu0 0.0
    %1223 = vmatprep.subr.mxu0 0.0
    %1224 = vmatpush1.xpose.msra.mxu0 0.0
    %1225 = vmatprep.subr.mxu0 0.0
    %1226 = vmatpush1.xpose.msra.mxu0 0.0
    %1227 = vmatprep.subr.mxu0 0.0
    %1228 = vmatpush1.xpose.msra.mxu0 0.0
    %1229 = vmatprep.subr.mxu0 0.0
    %1230 = vmatpush1.xpose.msra.mxu0 0.0
    %1231 = vmatprep.subr.mxu0 0.0
    %1232 = vmatpush1.xpose.msra.mxu0 0.0
    %1233 = vmatprep.subr.mxu0 0.0
    %1234 = vmatpush1.xpose.msra.mxu0 0.0
    %1235 = vmatprep.subr.mxu0 0.0
    %1236 = vmatpush1.xpose.msra.mxu0 0.0
    %1237 = vmatprep.subr.mxu0 0.0
    %1238 = vmatpush1.xpose.msra.mxu0 0.0
    %1239 = vmatprep.subr.mxu0 0.0
    %1240 = vmatpush1.xpose.msra.mxu0 0.0
    %1241 = vmatprep.subr.mxu0 0.0
    %1242 = vmatpush1.xpose.msra.mxu0 0.0
    %1243 = vmatprep.subr.mxu0 0.0
    %1244 = vmatpush1.xpose.msra.mxu0 0.0
    %1245 = vmatprep.subr.mxu0 0.0
    %1246 = vmatpush1.xpose.msra.mxu0 0.0
    %1247 = vmatprep.subr.mxu0 0.0
    %1248 = vmatpush1.xpose.msra.mxu0 0.0
    %1249 = vmatprep.subr.mxu0 0.0
    %1250 = vmatpush1.xpose.msra.mxu0 0.0
    %1251 = vmatprep.subr.mxu0 0.0
    %1252 = vmatpush1.xpose.msra.mxu0 0.0
    %1253 = vmatprep.subr.mxu0 0.0
    %1254 = vmatpush1.xpose.msra.mxu0 0.0
    %1255 = vmatprep.subr.mxu0 0.0
    %1256 = vmatpush1.xpose.msra.mxu0 0.0
    %1257 = vmatprep.subr.mxu0 0.0
    %1258 = vmatpush1.xpose.msra.mxu0 0.0
    %1259 = vmatprep.subr.mxu0 0.0
    %1260 = vmatpush1.xpose.msra.mxu0 0.0
    %1261 = vmatprep.mubr.f32.mxu0 0.0
    %1262 = vmatmul.mubr.f32.gmra.mrb[0].mxu0 %v1193
    %v1263 = vpop.f32.mrb[0].mxu0
    %v1264 = vadd.f32 0.0, %v1263
    %v1265 = vpop.f32.mrb[0].mxu0
    %1266 = vdwg.mxu0
    %v1267 = vmul.f32 %v1264, 0.35355338
    %v1268 = vsel %vm172, %v1267, -inf
    %1269 = vmax.xlane.f32.xlu0 %v1268
    %v1270 = vpop.xlane.xlu0 %1269
    %v1271 = vsub.f32 %v1267, %v1270
    %v1272 = vmul.f32 %v1271, 1.442695
    %v1273 = vpow.pop %v1272
    %v1274 = vsel %vm172, %v1273, 0.0
    %1275 = vadd.xlane.f32.xlu0 %v1274
    %v1276 = vpop.xlane.xlu0 %1275
    %v1277 = vrcp.pop %v1276
    %v1278 = vmul.f32 %v1273, %v1277
    %1279 = vrot.lane.b32.xlu0 %v166, 48
    %v1280 = vpop.permute.xlu0 %1279
    %v1283 = vsel %vm172, %v1278, 0
    %1285 = vmatprep.subr.mxu0 0.0
    %1286 = vmatpush1.msra.mxu0 %v1280
    %1287 = vmatprep.subr.mxu0 0.0
    %1288 = vmatpush1.msra.mxu0 0.0
    %1289 = vmatprep.subr.mxu0 0.0
    %1290 = vmatpush1.msra.mxu0 0.0
    %1291 = vmatprep.subr.mxu0 0.0
    %1292 = vmatpush1.msra.mxu0 0.0
    %1293 = vmatprep.subr.mxu0 0.0
    %1294 = vmatpush1.msra.mxu0 0.0
    %1295 = vmatprep.subr.mxu0 0.0
    %1296 = vmatpush1.msra.mxu0 0.0
    %1297 = vmatprep.subr.mxu0 0.0
    %1298 = vmatpush1.msra.mxu0 0.0
    %1299 = vmatprep.subr.mxu0 0.0
    %1300 = vmatpush1.msra.mxu0 0.0
    %1301 = vmatprep.subr.mxu0 0.0
    %1302 = vmatpush1.msra.mxu0 0.0
    %1303 = vmatprep.subr.mxu0 0.0
    %1304 = vmatpush1.msra.mxu0 0.0
    %1305 = vmatprep.subr.mxu0 0.0
    %1306 = vmatpush1.msra.mxu0 0.0
    %1307 = vmatprep.subr.mxu0 0.0
    %1308 = vmatpush1.msra.mxu0 0.0
    %1309 = vmatprep.subr.mxu0 0.0
    %1310 = vmatpush1.msra.mxu0 0.0
    %1311 = vmatprep.subr.mxu0 0.0
    %1312 = vmatpush1.msra.mxu0 0.0
    %1313 = vmatprep.subr.mxu0 0.0
    %1314 = vmatpush1.msra.mxu0 0.0
    %1315 = vmatprep.subr.mxu0 0.0
    %1316 = vmatpush1.msra.mxu0 0.0
    %1317 = vmatprep.subr.mxu0 0.0
    %1318 = vmatpush1.msra.mxu0 0.0
    %1319 = vmatprep.subr.mxu0 0.0
    %1320 = vmatpush1.msra.mxu0 0.0
    %1321 = vmatprep.subr.mxu0 0.0
    %1322 = vmatpush1.msra.mxu0 0.0
    %1323 = vmatprep.subr.mxu0 0.0
    %1324 = vmatpush1.msra.mxu0 0.0
    %1325 = vmatprep.subr.mxu0 0.0
    %1326 = vmatpush1.msra.mxu0 0.0
    %1327 = vmatprep.subr.mxu0 0.0
    %1328 = vmatpush1.msra.mxu0 0.0
    %1329 = vmatprep.subr.mxu0 0.0
    %1330 = vmatpush1.msra.mxu0 0.0
    %1331 = vmatprep.subr.mxu0 0.0
    %1332 = vmatpush1.msra.mxu0 0.0
    %1333 = vmatprep.subr.mxu0 0.0
    %1334 = vmatpush1.msra.mxu0 0.0
    %1335 = vmatprep.subr.mxu0 0.0
    %1336 = vmatpush1.msra.mxu0 0.0
    %1337 = vmatprep.subr.mxu0 0.0
    %1338 = vmatpush1.msra.mxu0 0.0
    %1339 = vmatprep.subr.mxu0 0.0
    %1340 = vmatpush1.msra.mxu0 0.0
    %1341 = vmatprep.subr.mxu0 0.0
    %1342 = vmatpush1.msra.mxu0 0.0
    %1343 = vmatprep.subr.mxu0 0.0
    %1344 = vmatpush1.msra.mxu0 0.0
    %1345 = vmatprep.subr.mxu0 0.0
    %1346 = vmatpush1.msra.mxu0 0.0
    %1347 = vmatprep.subr.mxu0 0.0
    %1348 = vmatpush1.msra.mxu0 0.0
    %1349 = vmatprep.mubr.f32.mxu0 0.0
    %1350 = vmatmul.mubr.f32.gmra.mrb[0].mxu0 %v1283
    %v1351 = vpop.f32.mrb[0].mxu0
    %v1352 = vadd.f32 0.0, %v1351
    %v1353 = vpop.f32.mrb[0].mxu0
    %1354 = vdwg.mxu0
    %1356 = vrot.lane.b32.xlu0 %v1352, 16
    %v1357 = vpop.permute.xlu0 %1356
    %1359 = vst.msk [vmem:[#allocation2 + $0x8] sm:$0xff] %vm678, %v1357
    %1360 = vrot.lane.b32.xlu0 %v166, 104
    %v1361 = vpop.permute.xlu0 %1360
    %1362 = vrot.lane.b32.xlu0 %v166, 72
    %v1363 = vpop.permute.xlu0 %1362
    %v1364 = vsel %vm172, %v1361, 0
    %v1366 = vsel %vm172, %v1363, 0
    %1368 = vmatprep.subr.mxu0 0.0
    %1369 = vmatpush1.xpose.msra.mxu0 %v1366
    %1370 = vmatprep.subr.mxu0 0.0
    %1371 = vmatpush1.xpose.msra.mxu0 0.0
    %1372 = vmatprep.subr.mxu0 0.0
    %1373 = vmatpush1.xpose.msra.mxu0 0.0
    %1374 = vmatprep.subr.mxu0 0.0
    %1375 = vmatpush1.xpose.msra.mxu0 0.0
    %1376 = vmatprep.subr.mxu0 0.0
    %1377 = vmatpush1.xpose.msra.mxu0 0.0
    %1378 = vmatprep.subr.mxu0 0.0
    %1379 = vmatpush1.xpose.msra.mxu0 0.0
    %1380 = vmatprep.subr.mxu0 0.0
    %1381 = vmatpush1.xpose.msra.mxu0 0.0
    %1382 = vmatprep.subr.mxu0 0.0
    %1383 = vmatpush1.xpose.msra.mxu0 0.0
    %1384 = vmatprep.subr.mxu0 0.0
    %1385 = vmatpush1.xpose.msra.mxu0 0.0
    %1386 = vmatprep.subr.mxu0 0.0
    %1387 = vmatpush1.xpose.msra.mxu0 0.0
    %1388 = vmatprep.subr.mxu0 0.0
    %1389 = vmatpush1.xpose.msra.mxu0 0.0
    %1390 = vmatprep.subr.mxu0 0.0
    %1391 = vmatpush1.xpose.msra.mxu0 0.0
    %1392 = vmatprep.subr.mxu0 0.0
    %1393 = vmatpush1.xpose.msra.mxu0 0.0
    %1394 = vmatprep.subr.mxu0 0.0
    %1395 = vmatpush1.xpose.msra.mxu0 0.0
    %1396 = vmatprep.subr.mxu0 0.0
    %1397 = vmatpush1.xpose.msra.mxu0 0.0
    %1398 = vmatprep.subr.mxu0 0.0
    %1399 = vmatpush1.xpose.msra.mxu0 0.0
    %1400 = vmatprep.subr.mxu0 0.0
    %1401 = vmatpush1.xpose.msra.mxu0 0.0
    %1402 = vmatprep.subr.mxu0 0.0
    %1403 = vmatpush1.xpose.msra.mxu0 0.0
    %1404 = vmatprep.subr.mxu0 0.0
    %1405 = vmatpush1.xpose.msra.mxu0 0.0
    %1406 = vmatprep.subr.mxu0 0.0
    %1407 = vmatpush1.xpose.msra.mxu0 0.0
    %1408 = vmatprep.subr.mxu0 0.0
    %1409 = vmatpush1.xpose.msra.mxu0 0.0
    %1410 = vmatprep.subr.mxu0 0.0
    %1411 = vmatpush1.xpose.msra.mxu0 0.0
    %1412 = vmatprep.subr.mxu0 0.0
    %1413 = vmatpush1.xpose.msra.mxu0 0.0
    %1414 = vmatprep.subr.mxu0 0.0
    %1415 = vmatpush1.xpose.msra.mxu0 0.0
    %1416 = vmatprep.subr.mxu0 0.0
    %1417 = vmatpush1.xpose.msra.mxu0 0.0
    %1418 = vmatprep.subr.mxu0 0.0
    %1419 = vmatpush1.xpose.msra.mxu0 0.0
    %1420 = vmatprep.subr.mxu0 0.0
    %1421 = vmatpush1.xpose.msra.mxu0 0.0
    %1422 = vmatprep.subr.mxu0 0.0
    %1423 = vmatpush1.xpose.msra.mxu0 0.0
    %1424 = vmatprep.subr.mxu0 0.0
    %1425 = vmatpush1.xpose.msra.mxu0 0.0
    %1426 = vmatprep.subr.mxu0 0.0
    %1427 = vmatpush1.xpose.msra.mxu0 0.0
    %1428 = vmatprep.subr.mxu0 0.0
    %1429 = vmatpush1.xpose.msra.mxu0 0.0
    %1430 = vmatprep.subr.mxu0 0.0
    %1431 = vmatpush1.xpose.msra.mxu0 0.0
    %1432 = vmatprep.mubr.f32.mxu0 0.0
    %1433 = vmatmul.mubr.f32.gmra.mrb[0].mxu0 %v1364
    %v1434 = vpop.f32.mrb[0].mxu0
    %v1435 = vadd.f32 0.0, %v1434
    %v1436 = vpop.f32.mrb[0].mxu0
    %1437 = vdwg.mxu0
    %v1438 = vmul.f32 %v1435, 0.35355338
    %v1439 = vsel %vm172, %v1438, -inf
    %1440 = vmax.xlane.f32.xlu0 %v1439
    %v1441 = vpop.xlane.xlu0 %1440
    %v1442 = vsub.f32 %v1438, %v1441
    %v1443 = vmul.f32 %v1442, 1.442695
    %v1444 = vpow.pop %v1443
    %v1445 = vsel %vm172, %v1444, 0.0
    %1446 = vadd.xlane.f32.xlu0 %v1445
    %v1447 = vpop.xlane.xlu0 %1446
    %v1448 = vrcp.pop %v1447
    %v1449 = vmul.f32 %v1444, %v1448
    %1450 = vrot.lane.b32.xlu0 %v166, 40
    %v1451 = vpop.permute.xlu0 %1450
    %v1454 = vsel %vm172, %v1449, 0
    %1456 = vmatprep.subr.mxu0 0.0
    %1457 = vmatpush1.msra.mxu0 %v1451
    %1458 = vmatprep.subr.mxu0 0.0
    %1459 = vmatpush1.msra.mxu0 0.0
    %1460 = vmatprep.subr.mxu0 0.0
    %1461 = vmatpush1.msra.mxu0 0.0
    %1462 = vmatprep.subr.mxu0 0.0
    %1463 = vmatpush1.msra.mxu0 0.0
    %1464 = vmatprep.subr.mxu0 0.0
    %1465 = vmatpush1.msra.mxu0 0.0
    %1466 = vmatprep.subr.mxu0 0.0
    %1467 = vmatpush1.msra.mxu0 0.0
    %1468 = vmatprep.subr.mxu0 0.0
    %1469 = vmatpush1.msra.mxu0 0.0
    %1470 = vmatprep.subr.mxu0 0.0
    %1471 = vmatpush1.msra.mxu0 0.0
    %1472 = vmatprep.subr.mxu0 0.0
    %1473 = vmatpush1.msra.mxu0 0.0
    %1474 = vmatprep.subr.mxu0 0.0
    %1475 = vmatpush1.msra.mxu0 0.0
    %1476 = vmatprep.subr.mxu0 0.0
    %1477 = vmatpush1.msra.mxu0 0.0
    %1478 = vmatprep.subr.mxu0 0.0
    %1479 = vmatpush1.msra.mxu0 0.0
    %1480 = vmatprep.subr.mxu0 0.0
    %1481 = vmatpush1.msra.mxu0 0.0
    %1482 = vmatprep.subr.mxu0 0.0
    %1483 = vmatpush1.msra.mxu0 0.0
    %1484 = vmatprep.subr.mxu0 0.0
    %1485 = vmatpush1.msra.mxu0 0.0
    %1486 = vmatprep.subr.mxu0 0.0
    %1487 = vmatpush1.msra.mxu0 0.0
    %1488 = vmatprep.subr.mxu0 0.0
    %1489 = vmatpush1.msra.mxu0 0.0
    %1490 = vmatprep.subr.mxu0 0.0
    %1491 = vmatpush1.msra.mxu0 0.0
    %1492 = vmatprep.subr.mxu0 0.0
    %1493 = vmatpush1.msra.mxu0 0.0
    %1494 = vmatprep.subr.mxu0 0.0
    %1495 = vmatpush1.msra.mxu0 0.0
    %1496 = vmatprep.subr.mxu0 0.0
    %1497 = vmatpush1.msra.mxu0 0.0
    %1498 = vmatprep.subr.mxu0 0.0
    %1499 = vmatpush1.msra.mxu0 0.0
    %1500 = vmatprep.subr.mxu0 0.0
    %1501 = vmatpush1.msra.mxu0 0.0
    %1502 = vmatprep.subr.mxu0 0.0
    %1503 = vmatpush1.msra.mxu0 0.0
    %1504 = vmatprep.subr.mxu0 0.0
    %1505 = vmatpush1.msra.mxu0 0.0
    %1506 = vmatprep.subr.mxu0 0.0
    %1507 = vmatpush1.msra.mxu0 0.0
    %1508 = vmatprep.subr.mxu0 0.0
    %1509 = vmatpush1.msra.mxu0 0.0
    %1510 = vmatprep.subr.mxu0 0.0
    %1511 = vmatpush1.msra.mxu0 0.0
    %1512 = vmatprep.subr.mxu0 0.0
    %1513 = vmatpush1.msra.mxu0 0.0
    %1514 = vmatprep.subr.mxu0 0.0
    %1515 = vmatpush1.msra.mxu0 0.0
    %1516 = vmatprep.subr.mxu0 0.0
    %1517 = vmatpush1.msra.mxu0 0.0
    %1518 = vmatprep.subr.mxu0 0.0
    %1519 = vmatpush1.msra.mxu0 0.0
    %1520 = vmatprep.mubr.f32.mxu0 0.0
    %1521 = vmatmul.mubr.f32.gmra.mrb[0].mxu0 %v1454
    %v1522 = vpop.f32.mrb[0].mxu0
    %v1523 = vadd.f32 0.0, %v1522
    %v1524 = vpop.f32.mrb[0].mxu0
    %1525 = vdwg.mxu0
    %1527 = vrot.lane.b32.xlu0 %v1523, 24
    %v1528 = vpop.permute.xlu0 %1527
    %1530 = vst.msk [vmem:[#allocation2 + $0x8] sm:$0xff] %vm850, %v1528
    %v1531 = vld [vmem:[#allocation2] sm:$0xff]
    %v1532 = vld [vmem:[#allocation2 + $0x8] sm:$0xff]
    %v1533 = vld [vmem:[%s4] sm:$0xff]
    %v1534 = vld [vmem:[%s4 + $0x8] sm:$0xff]
    %v1535 = vld [vmem:[%s4 + $0x10] sm:$0xff]
    %v1536 = vld [vmem:[%s4 + $0x18] sm:$0xff]
    %v1537 = vld [vmem:[%s5] sm:$0x1]
    %v1539 = vlaneseq
    %v1540 = vshrl.u32 %v1539, 7
    %v1541 = vsub.s32 0, %v1540
    %v1542 = vrot.slane %v1537, %v1541
    %v1545 = vsel %vm40, %v1531, 0
    %v1548 = vsel %vm40, %v1532, 0
    %1550 = vmatprep.subr.mxu0 0.0
    %1551 = vmatpush1.msra.mxu0 %v1533
    %1552 = vmatprep.subr.mxu0 0.0
    %1553 = vmatpush1.msra.mxu0 %v1534
    %1554 = vmatprep.subr.mxu0 0.0
    %1555 = vmatpush1.msra.mxu0 %v1535
    %1556 = vmatprep.subr.mxu0 0.0
    %1557 = vmatpush1.msra.mxu0 %v1536
    %1558 = vmatprep.subr.mxu0 0.0
    %1559 = vmatpush1.msra.mxu0 0.0
    %1560 = vmatprep.subr.mxu0 0.0
    %1561 = vmatpush1.msra.mxu0 0.0
    %1562 = vmatprep.subr.mxu0 0.0
    %1563 = vmatpush1.msra.mxu0 0.0
    %1564 = vmatprep.subr.mxu0 0.0
    %1565 = vmatpush1.msra.mxu0 0.0
    %1566 = vmatprep.subr.mxu0 0.0
    %1567 = vmatpush1.msra.mxu0 0.0
    %1568 = vmatprep.subr.mxu0 0.0
    %1569 = vmatpush1.msra.mxu0 0.0
    %1570 = vmatprep.subr.mxu0 0.0
    %1571 = vmatpush1.msra.mxu0 0.0
    %1572 = vmatprep.subr.mxu0 0.0
    %1573 = vmatpush1.msra.mxu0 0.0
    %1574 = vmatprep.subr.mxu0 0.0
    %1575 = vmatpush1.msra.mxu0 0.0
    %1576 = vmatprep.subr.mxu0 0.0
    %1577 = vmatpush1.msra.mxu0 0.0
    %1578 = vmatprep.subr.mxu0 0.0
    %1579 = vmatpush1.msra.mxu0 0.0
    %1580 = vmatprep.subr.mxu0 0.0
    %1581 = vmatpush1.msra.mxu0 0.0
    %1582 = vmatprep.subr.mxu0 0.0
    %1583 = vmatpush1.msra.mxu0 0.0
    %1584 = vmatprep.subr.mxu0 0.0
    %1585 = vmatpush1.msra.mxu0 0.0
    %1586 = vmatprep.subr.mxu0 0.0
    %1587 = vmatpush1.msra.mxu0 0.0
    %1588 = vmatprep.subr.mxu0 0.0
    %1589 = vmatpush1.msra.mxu0 0.0
    %1590 = vmatprep.subr.mxu0 0.0
    %1591 = vmatpush1.msra.mxu0 0.0
    %1592 = vmatprep.subr.mxu0 0.0
    %1593 = vmatpush1.msra.mxu0 0.0
    %1594 = vmatprep.subr.mxu0 0.0
    %1595 = vmatpush1.msra.mxu0 0.0
    %1596 = vmatprep.subr.mxu0 0.0
    %1597 = vmatpush1.msra.mxu0 0.0
    %1598 = vmatprep.subr.mxu0 0.0
    %1599 = vmatpush1.msra.mxu0 0.0
    %1600 = vmatprep.subr.mxu0 0.0
    %1601 = vmatpush1.msra.mxu0 0.0
    %1602 = vmatprep.subr.mxu0 0.0
    %1603 = vmatpush1.msra.mxu0 0.0
    %1604 = vmatprep.subr.mxu0 0.0
    %1605 = vmatpush1.msra.mxu0 0.0
    %1606 = vmatprep.subr.mxu0 0.0
    %1607 = vmatpush1.msra.mxu0 0.0
    %1608 = vmatprep.subr.mxu0 0.0
    %1609 = vmatpush1.msra.mxu0 0.0
    %1610 = vmatprep.subr.mxu0 0.0
    %1611 = vmatpush1.msra.mxu0 0.0
    %1612 = vmatprep.subr.mxu0 0.0
    %1613 = vmatpush1.msra.mxu0 0.0
    %1614 = vmatprep.mubr.f32.mxu0 0.0
    %1615 = vmatmul.mubr.f32.gmra.mrb[0].mxu0 %v1545
    %v1616 = vpop.f32.mrb[0].mxu0
    %v1617 = vadd.f32 %v1542, %v1616
    %v1618 = vpop.f32.mrb[0].mxu0
    %1619 = vmatprep.mubr.f32.mxu0 0.0
    %1620 = vmatmul.mubr.f32.gmra.mrb[0].mxu0 %v1548
    %v1621 = vpop.f32.mrb[0].mxu0
    %v1622 = vadd.f32 %v1542, %v1621
    %v1623 = vpop.f32.mrb[0].mxu0
    %1624 = vdwg.mxu0
    %v1625 = vadd.f32 %v36, %v1617
    %v1626 = vadd.f32 %v37, %v1622
    %v1627 = vsel %vm40, %v1625, 0.0
    %1628 = vadd.xlane.f32.xlu0 %v1627
    %v1629 = vpop.xlane.xlu0 %1628
    %v1630 = vsel %vm40, %v1626, 0.0
    %1631 = vadd.xlane.f32.xlu0 %v1630
    %v1632 = vpop.xlane.xlu0 %1631
    %v1633 = vmul.f32 %v1629, %v47
    %v1634 = vmul.f32 %v1632, %v47
    %v1635 = vsub.f32 %v1625, %v1633
    %v1636 = vsub.f32 %v1626, %v1634
    %v1637 = vmul.f32 %v1635, %v1635
    %v1638 = vmul.f32 %v1636, %v1636
    %v1639 = vsel %vm40, %v1637, 0.0
    %1640 = vadd.xlane.f32.xlu0 %v1639
    %v1641 = vpop.xlane.xlu0 %1640
    %v1642 = vsel %vm40, %v1638, 0.0
    %1643 = vadd.xlane.f32.xlu0 %v1642
    %v1644 = vpop.xlane.xlu0 %1643
    %v1645 = vmul.f32 %v1641, %v47
    %v1646 = vmul.f32 %v1644, %v47
    %v1647 = vadd.f32 %v1645, 1e-05
    %v1648 = vadd.f32 %v1646, 1e-05
    %v1649 = vrsqrt.pop %v1647
    %v1650 = vrsqrt.pop %v1648
    %v1651 = vmul.f32 %v1635, %v1649
    %v1652 = vmul.f32 %v1636, %v1650
    %v1653 = vmul.f32 %v1651, %v72
    %v1654 = vmul.f32 %v1652, %v72
    %v1655 = vadd.f32 %v1653, %v80
    %v1656 = vadd.f32 %v1654, %v80
    %v1657 = vld [vmem:[%s6] sm:$0xff]
    %v1658 = vld [vmem:[%s6 + $0x8] sm:$0xff]
    %v1659 = vld [vmem:[%s6 + $0x10] sm:$0xff]
    %v1660 = vld [vmem:[%s6 + $0x18] sm:$0xff]
    %v1661 = vld [vmem:[%s7] sm:$0x1]
    %v1663 = vlaneseq
    %v1664 = vshrl.u32 %v1663, 7
    %v1665 = vsub.s32 0, %v1664
    %v1666 = vrot.slane %v1661, %v1665
    %v1669 = vsel %vm40, %v1655, 0
    %v1672 = vsel %vm40, %v1656, 0
    %1674 = vmatprep.subr.mxu0 0.0
    %1675 = vmatpush1.msra.mxu0 %v1657
    %1676 = vmatprep.subr.mxu0 0.0
    %1677 = vmatpush1.msra.mxu0 %v1658
    %1678 = vmatprep.subr.mxu0 0.0
    %1679 = vmatpush1.msra.mxu0 %v1659
    %1680 = vmatprep.subr.mxu0 0.0
    %1681 = vmatpush1.msra.mxu0 %v1660
    %1682 = vmatprep.subr.mxu0 0.0
    %1683 = vmatpush1.msra.mxu0 0.0
    %1684 = vmatprep.subr.mxu0 0.0
    %1685 = vmatpush1.msra.mxu0 0.0
    %1686 = vmatprep.subr.mxu0 0.0
    %1687 = vmatpush1.msra.mxu0 0.0
    %1688 = vmatprep.subr.mxu0 0.0
    %1689 = vmatpush1.msra.mxu0 0.0
    %1690 = vmatprep.subr.mxu0 0.0
    %1691 = vmatpush1.msra.mxu0 0.0
    %1692 = vmatprep.subr.mxu0 0.0
    %1693 = vmatpush1.msra.mxu0 0.0
    %1694 = vmatprep.subr.mxu0 0.0
    %1695 = vmatpush1.msra.mxu0 0.0
    %1696 = vmatprep.subr.mxu0 0.0
    %1697 = vmatpush1.msra.mxu0 0.0
    %1698 = vmatprep.subr.mxu0 0.0
    %1699 = vmatpush1.msra.mxu0 0.0
    %1700 = vmatprep.subr.mxu0 0.0
    %1701 = vmatpush1.msra.mxu0 0.0
    %1702 = vmatprep.subr.mxu0 0.0
    %1703 = vmatpush1.msra.mxu0 0.0
    %1704 = vmatprep.subr.mxu0 0.0
    %1705 = vmatpush1.msra.mxu0 0.0
    %1706 = vmatprep.subr.mxu0 0.0
    %1707 = vmatpush1.msra.mxu0 0.0
    %1708 = vmatprep.subr.mxu0 0.0
    %1709 = vmatpush1.msra.mxu0 0.0
    %1710 = vmatprep.subr.mxu0 0.0
    %1711 = vmatpush1.msra.mxu0 0.0
    %1712 = vmatprep.subr.mxu0 0.0
    %1713 = vmatpush1.msra.mxu0 0.0
    %1714 = vmatprep.subr.mxu0 0.0
    %1715 = vmatpush1.msra.mxu0 0.0
    %1716 = vmatprep.subr.mxu0 0.0
    %1717 = vmatpush1.msra.mxu0 0.0
    %1718 = vmatprep.subr.mxu0 0.0
    %1719 = vmatpush1.msra.mxu0 0.0
    %1720 = vmatprep.subr.mxu0 0.0
    %1721 = vmatpush1.msra.mxu0 0.0
    %1722 = vmatprep.subr.mxu0 0.0
    %1723 = vmatpush1.msra.mxu0 0.0
    %1724 = vmatprep.subr.mxu0 0.0
    %1725 = vmatpush1.msra.mxu0 0.0
    %1726 = vmatprep.subr.mxu0 0.0
    %1727 = vmatpush1.msra.mxu0 0.0
    %1728 = vmatprep.subr.mxu0 0.0
    %1729 = vmatpush1.msra.mxu0 0.0
    %1730 = vmatprep.subr.mxu0 0.0
    %1731 = vmatpush1.msra.mxu0 0.0
    %1732 = vmatprep.subr.mxu0 0.0
    %1733 = vmatpush1.msra.mxu0 0.0
    %1734 = vmatprep.subr.mxu0 0.0
    %1735 = vmatpush1.msra.mxu0 0.0
    %1736 = vmatprep.subr.mxu0 0.0
    %1737 = vmatpush1.msra.mxu0 0.0
    %1738 = vmatprep.mubr.f32.mxu0 0.0
    %1739 = vmatmul.mubr.f32.gmra.mrb[0].mxu0 %v1669
    %v1740 = vpop.f32.mrb[0].mxu0
    %v1741 = vadd.f32 %v1666, %v1740
    %v1742 = vpop.f32.mrb[0].mxu0
    %1743 = vmatprep.mubr.f32.mxu0 0.0
    %1744 = vmatmul.mubr.f32.gmra.mrb[0].mxu0 %v1672
    %v1745 = vpop.f32.mrb[0].mxu0
    %v1746 = vadd.f32 %v1666, %v1745
    %v1747 = vpop.f32.mrb[0].mxu0
    %1748 = vdwg.mxu0
    %v1749 = vmul.f32 %v1741, 0.5
    %v1750 = vmul.f32 %v1746, 0.5
    %v1751 = vmul.f32 %v1741, 0.70710677
    %v1752 = vmul.f32 %v1746, 0.70710677
    %v1753 = verf.f32.pop %v1751
    %v1754 = verf.f32.pop %v1752
    %v1755 = vadd.f32 %v1753, 1.0
    %v1756 = vadd.f32 %v1754, 1.0
    %v1757 = vmul.f32 %v1749, %v1755
    %v1758 = vmul.f32 %v1750, %v1756
    %v1759 = vld [vmem:[%s8] sm:$0xff]
    %v1760 = vld [vmem:[%s8 + $0x8] sm:$0xff]
    %v1761 = vld [vmem:[%s8 + $0x10] sm:$0xff]
    %v1762 = vld [vmem:[%s8 + $0x18] sm:$0xff]
    %v1763 = vld [vmem:[%s8 + $0x20] sm:$0xff]
    %v1764 = vld [vmem:[%s8 + $0x28] sm:$0xff]
    %v1765 = vld [vmem:[%s8 + $0x30] sm:$0xff]
    %v1766 = vld [vmem:[%s8 + $0x38] sm:$0xff]
    %v1767 = vld [vmem:[%s8 + $0x40] sm:$0xff]
    %v1768 = vld [vmem:[%s8 + $0x48] sm:$0xff]
    %v1769 = vld [vmem:[%s8 + $0x50] sm:$0xff]
    %v1770 = vld [vmem:[%s8 + $0x58] sm:$0xff]
    %v1771 = vld [vmem:[%s8 + $0x60] sm:$0xff]
    %v1772 = vld [vmem:[%s8 + $0x68] sm:$0xff]
    %v1773 = vld [vmem:[%s8 + $0x70] sm:$0xff]
    %v1774 = vld [vmem:[%s8 + $0x78] sm:$0xff]
    %v1775 = vld [vmem:[%s9] sm:$0x1]
    %v1777 = vlaneseq
    %v1778 = vshrl.u32 %v1777, 7
    %v1779 = vsub.s32 0, %v1778
    %v1780 = vrot.slane %v1775, %v1779
    %1782 = vmatprep.subr.mxu0 0.0
    %1783 = vmatpush1.msra.mxu0 %v1759
    %1784 = vmatprep.subr.mxu0 0.0
    %1785 = vmatpush1.msra.mxu0 %v1760
    %1786 = vmatprep.subr.mxu0 0.0
    %1787 = vmatpush1.msra.mxu0 %v1761
    %1788 = vmatprep.subr.mxu0 0.0
    %1789 = vmatpush1.msra.mxu0 %v1762
    %1790 = vmatprep.subr.mxu0 0.0
    %1791 = vmatpush1.msra.mxu0 %v1763
    %1792 = vmatprep.subr.mxu0 0.0
    %1793 = vmatpush1.msra.mxu0 %v1764
    %1794 = vmatprep.subr.mxu0 0.0
    %1795 = vmatpush1.msra.mxu0 %v1765
    %1796 = vmatprep.subr.mxu0 0.0
    %1797 = vmatpush1.msra.mxu0 %v1766
    %1798 = vmatprep.subr.mxu0 0.0
    %1799 = vmatpush1.msra.mxu0 %v1767
    %1800 = vmatprep.subr.mxu0 0.0
    %1801 = vmatpush1.msra.mxu0 %v1768
    %1802 = vmatprep.subr.mxu0 0.0
    %1803 = vmatpush1.msra.mxu0 %v1769
    %1804 = vmatprep.subr.mxu0 0.0
    %1805 = vmatpush1.msra.mxu0 %v1770
    %1806 = vmatprep.subr.mxu0 0.0
    %1807 = vmatpush1.msra.mxu0 %v1771
    %1808 = vmatprep.subr.mxu0 0.0
    %1809 = vmatpush1.msra.mxu0 %v1772
    %1810 = vmatprep.subr.mxu0 0.0
    %1811 = vmatpush1.msra.mxu0 %v1773
    %1812 = vmatprep.subr.mxu0 0.0
    %1813 = vmatpush1.msra.mxu0 %v1774
    %1814 = vmatprep.subr.mxu0 0.0
    %1815 = vmatpush1.msra.mxu0 0.0
    %1816 = vmatprep.subr.mxu0 0.0
    %1817 = vmatpush1.msra.mxu0 0.0
    %1818 = vmatprep.subr.mxu0 0.0
    %1819 = vmatpush1.msra.mxu0 0.0
    %1820 = vmatprep.subr.mxu0 0.0
    %1821 = vmatpush1.msra.mxu0 0.0
    %1822 = vmatprep.subr.mxu0 0.0
    %1823 = vmatpush1.msra.mxu0 0.0
    %1824 = vmatprep.subr.mxu0 0.0
    %1825 = vmatpush1.msra.mxu0 0.0
    %1826 = vmatprep.subr.mxu0 0.0
    %1827 = vmatpush1.msra.mxu0 0.0
    %1828 = vmatprep.subr.mxu0 0.0
    %1829 = vmatpush1.msra.mxu0 0.0
    %1830 = vmatprep.subr.mxu0 0.0
    %1831 = vmatpush1.msra.mxu0 0.0
    %1832 = vmatprep.subr.mxu0 0.0
    %1833 = vmatpush1.msra.mxu0 0.0
    %1834 = vmatprep.subr.mxu0 0.0
    %1835 = vmatpush1.msra.mxu0 0.0
    %1836 = vmatprep.subr.mxu0 0.0
    %1837 = vmatpush1.msra.mxu0 0.0
    %1838 = vmatprep.subr.mxu0 0.0
    %1839 = vmatpush1.msra.mxu0 0.0
    %1840 = vmatprep.subr.mxu0 0.0
    %1841 = vmatpush1.msra.mxu0 0.0
    %1842 = vmatprep.subr.mxu0 0.0
    %1843 = vmatpush1.msra.mxu0 0.0
    %1844 = vmatprep.subr.mxu0 0.0
    %1845 = vmatpush1.msra.mxu0 0.0
    %1846 = vmatprep.mubr.f32.mxu0 0.0
    %1847 = vmatmul.mubr.f32.gmra.mrb[0].mxu0 %v1757
    %v1848 = vpop.f32.mrb[0].mxu0
    %v1849 = vadd.f32 %v1780, %v1848
    %v1850 = vpop.f32.mrb[0].mxu0
    %1851 = vmatprep.mubr.f32.mxu0 0.0
    %1852 = vmatmul.mubr.f32.gmra.mrb[0].mxu0 %v1758
    %v1853 = vpop.f32.mrb[0].mxu0
    %v1854 = vadd.f32 %v1780, %v1853
    %v1855 = vpop.f32.mrb[0].mxu0
    %1856 = vdwg.mxu0
    %v1857 = vadd.f32 %v1625, %v1849
    %v1858 = vadd.f32 %v1626, %v1854
    %1859 = vst.msk [vmem:[#allocation3] sm:$0xff] %vm40, %v1857
    %1860 = vst.msk [vmem:[#allocation3 + $0x8] sm:$0xff] %vm40, %v1858
    // Predicated region
    $region42: #{encoder_block.1} parent=1 // pred_check
      _
    $region43: #{encoder_block.1} parent=1 // pred_check_branch
      %1862 = sbr.rel (0) target = $region45
    $region44: #{encoder_block.1} parent=1 // pred_region
      %s1864 = ssub.s32 256, 256
      %1865 = vsyncadd [#allocation4], %s1864
      %s1866 = sshll.u32 [#allocation3], 4
      %s1867 = int_to_ptr.vmem [resolvable:$true] %s1866
      %1872 = dma.vmem_to_hbm [thread:$0]  %s1867, 256, %s10, [#allocation4], 128, 128, 8
    $region45: #{encoder_block.1} parent=1 // pred_fallthru
      _
    // Predicated region
    $region46: #{encoder_block.1} parent=1 // pred_check
      _
    $region47: #{encoder_block.1} parent=1 // pred_check_branch
      %1874 = sbr.rel (0) target = $region49
    $region48: #{encoder_block.1} parent=1 // pred_region
      %1875 = dma.done [#allocation4], 256
    $region49: #{encoder_block.1} parent=1 // pred_fallthru
      _
    %1876 = vsyncpa [#allocation4], 1

</llo_original>
